<compile_context>
chip_gen: v7x
topology: tpu7x:2x2x1
jax: 0.10.0
libtpu: 0.0.40
codegen_flags: <defaults>
</compile_context>

<pallas_src>
import jax
import jax.numpy as jnp
from jax import lax
from jax.experimental import pallas as pl
from jax.experimental.pallas import tpu as pltpu


# ---------------------------------------------------------------- fused kernel
def cos_attn_fused_kernel(det_ref, aim_ref,
                          w_det_ref, b_det_ref,
                          w_aim_ref, b_aim_ref,
                          ww_ref, wb_ref, wg_ref, wbeta_ref,
                          qw_ref, qb_ref, qg_ref, qbeta_ref,
                          w1t_ref, b1_ref, w2t_ref, b2_ref,
                          act_det_ref, act_aim_ref,
                          ax_s, dx_s):
    B, _, Nd = det_ref.shape
    Na = aim_ref.shape[2]
    Ci = ww_ref.shape[0]

    w_det = w_det_ref[...]      # (2Ci, Cd)   rows = [phi_w ; g1_w]
    b_det = b_det_ref[...]      # (2Ci, 1)
    w_aim = w_aim_ref[...]      # (2Ci, Ca)   rows = [theta_w ; g2_w]
    b_aim = b_aim_ref[...]      # (2Ci, 1)
    ww, wb = ww_ref[...], wb_ref[...]
    qw, qb = qw_ref[...], qb_ref[...]

    inv_nd = 1.0 / Nd
    inv_na = 1.0 / Na

    # ---- per-batch matmul stage (B is tiny & static -> fully unrolled) ----
    for b in range(B):
        det_b = det_ref[b]                       # (Cd, Nd)  lanes = N
        aim_b = aim_ref[b]                       # (Ca, Na)

        # batched 1x1 convs: one matmul covers two conv branches per input
        det_proj = jnp.dot(w_det, det_b, preferred_element_type=jnp.float32) + b_det
        aim_proj = jnp.dot(w_aim, aim_b, preferred_element_type=jnp.float32) + b_aim
        phi_x = det_proj[:Ci]                    # (Ci, Nd)
        d_x = det_proj[Ci:]                      # (Ci, Nd)   == g1(detect)
        theta_x = aim_proj[:Ci]                  # (Ci, Na)
        a_x = aim_proj[Ci:]                      # (Ci, Na)   == g2(aim)

        # f[n, m] = sum_c theta[c, n] * phi[c, m]   (contract axis 0; no transpose)
        f = lax.dot_general(theta_x, phi_x, (((0,), (0,)), ((), ())),
                            preferred_element_type=jnp.float32)      # (Na, Nd)

        # non_aim_pre = (f / Nd) @ d_x  -> channels-first: contract over f axis 1
        na_pre = lax.dot_general(d_x, f, (((1,), (1,)), ((), ())),
                                 preferred_element_type=jnp.float32) * inv_nd  # (Ci, Na)
        # non_det_pre = (f^T / Na) @ a_x -> channels-first: a_x @ f
        nd_pre = jnp.dot(a_x, f, preferred_element_type=jnp.float32) * inv_na  # (Ci, Nd)

        # W / Q 1x1 convs -> straight into the VMEM-resident output refs
        # (BN + residual need cross-batch stats, applied in place below).
        act_aim_ref[b] = jnp.dot(ww, na_pre, preferred_element_type=jnp.float32) + wb
        act_det_ref[b] = jnp.dot(qw, nd_pre, preferred_element_type=jnp.float32) + qb
        ax_s[b] = a_x
        dx_s[b] = d_x

    # ---- train-mode BatchNorm2d (stats over batch & spatial) + residual ----
    def bn_add(out_ref, gamma, beta, res):
        x = out_ref[...]
        m = jnp.mean(x, axis=(0, 2), keepdims=True)
        xc = x - m                                           # reuse centered tensor
        var = jnp.mean(xc * xc, axis=(0, 2), keepdims=True)
        xn = xc * lax.rsqrt(var + 1e-5)
        return xn * gamma[None] + beta[None] + res

    non_aim = bn_add(act_aim_ref, wg_ref[...], wbeta_ref[...], ax_s[...])   # (B, Ci, Na)
    non_det = bn_add(act_det_ref, qg_ref[...], qbeta_ref[...], dx_s[...])   # (B, Ci, Nd)

    # ---- ChannelGate(non_aim): avg & max pooled through ONE shared MLP pass ----
    avg_pool = jnp.mean(non_aim, axis=2)                     # (B, Ci)
    max_pool = jnp.max(non_aim, axis=2)                      # (B, Ci)
    pooled = jnp.concatenate([avg_pool, max_pool], axis=0)   # (2B, Ci)
    h = jnp.maximum(
        jnp.dot(pooled, w1t_ref[...], preferred_element_type=jnp.float32) + b1_ref[...],
        0.0)
    o = jnp.dot(h, w2t_ref[...], preferred_element_type=jnp.float32) + b2_ref[...]
    scale = jax.nn.sigmoid(o[:B] + o[B:])                    # (B, Ci)

    act_aim_ref[...] = non_aim * scale[:, :, None]
    act_det_ref[...] = non_det * scale[:, :, None]


# ---------------------------------------------------------------- wrapper
def _full_spec(shape):
    nd = len(shape)
    return pl.BlockSpec(shape, lambda i, _n=nd: (0,) * _n)


def cos_attn_no_forward(params, detect, aim):
    """detect: (B, inplanes, Hd, Wd) NCHW, aim: (B, 32, Ha, Wa) NCHW."""
    B, Cd, Hd, Wd = detect.shape
    _, Ca, Ha, Wa = aim.shape
    Nd, Na = Hd * Wd, Ha * Wa
    Ci = params["W_w"].shape[0]

    # NCHW is already channels-first -> just flatten spatial, no transpose.
    det_cn = detect.reshape(B, Cd, Nd).astype(jnp.float32)
    aim_cn = aim.reshape(B, Ca, Na).astype(jnp.float32)

    # Batch the convs that share an input; reorient gate MLP weights (trace-time, free).
    w_det = jnp.concatenate([params["phi_w"], params["g1_w"]], axis=0)     # (2Ci, Cd)
    b_det = jnp.concatenate([params["phi_b"], params["g1_b"]]).reshape(2 * Ci, 1)
    w_aim = jnp.concatenate([params["theta_w"], params["g2_w"]], axis=0)   # (2Ci, Ca)
    b_aim = jnp.concatenate([params["theta_b"], params["g2_b"]]).reshape(2 * Ci, 1)

    col = lambda v: v.reshape(-1, 1)
    row = lambda v: v.reshape(1, -1)

    in_specs = [
        _full_spec((B, Cd, Nd)), _full_spec((B, Ca, Na)),
        _full_spec((2 * Ci, Cd)), _full_spec((2 * Ci, 1)),
        _full_spec((2 * Ci, Ca)), _full_spec((2 * Ci, 1)),
        _full_spec((Ci, Ci)), _full_spec((Ci, 1)), _full_spec((Ci, 1)), _full_spec((Ci, 1)),
        _full_spec((Ci, Ci)), _full_spec((Ci, 1)), _full_spec((Ci, 1)), _full_spec((Ci, 1)),
        _full_spec((Ci, Ci)), _full_spec((1, Ci)), _full_spec((Ci, Ci)), _full_spec((1, Ci)),
    ]
    out_specs = (_full_spec((B, Ci, Nd)), _full_spec((B, Ci, Na)))

    act_det, act_aim = pl.pallas_call(
        cos_attn_fused_kernel,
        out_shape=(jax.ShapeDtypeStruct((B, Ci, Nd), jnp.float32),
                   jax.ShapeDtypeStruct((B, Ci, Na), jnp.float32)),
        grid=(1,),
        in_specs=in_specs,
        out_specs=out_specs,
        scratch_shapes=[pltpu.VMEM((B, Ci, Na), jnp.float32),   # a_x residual stash
                        pltpu.VMEM((B, Ci, Nd), jnp.float32)],  # d_x residual stash
        compiler_params=pltpu.CompilerParams(dimension_semantics=("arbitrary",)),
    )(det_cn, aim_cn, w_det, b_det, w_aim, b_aim,
      params["W_w"], col(params["W_b"]), col(params["W_gamma"]), col(params["W_beta"]),
      params["Q_w"], col(params["Q_b"]), col(params["Q_gamma"]), col(params["Q_beta"]),
      params["cg_w1"].T, row(params["cg_b1"]), params["cg_w2"].T, row(params["cg_b2"]))

    # (B, Ci, N) -> NCHW is a pure reshape (no transpose).
    return act_det.reshape(B, Ci, Hd, Wd), act_aim.reshape(B, Ci, Ha, Wa)


# ---------------------------------------------------------------- parameters
def init_params(key, inplanes, inter):
    ks = jax.random.split(key, 12)
    p = {}

    def w(k, shape, fan_in):
        return (jax.random.normal(k, shape, jnp.float32) / jnp.sqrt(fan_in)).astype(jnp.float32)

    p["g1_w"]    = w(ks[0], (inter, inplanes), inplanes)
    p["g1_b"]    = w(ks[1], (inter,), inplanes)
    p["g2_w"]    = w(ks[2], (inter, 32), 32)
    p["g2_b"]    = w(ks[3], (inter,), 32)
    p["theta_w"] = w(ks[4], (inter, 32), 32)
    p["theta_b"] = w(ks[5], (inter,), 32)
    p["phi_w"]   = w(ks[6], (inter, inplanes), inplanes)
    p["phi_b"]   = w(ks[7], (inter,), inplanes)
    p["W_w"]     = w(ks[8], (inter, inter), inter)
    p["W_b"]     = w(ks[9], (inter,), inter)
    p["W_gamma"] = jnp.zeros((inter,), jnp.float32)   # nn.init.constant_(.., 0)
    p["W_beta"]  = jnp.zeros((inter,), jnp.float32)
    p["Q_w"]     = w(ks[10], (inter, inter), inter)
    p["Q_b"]     = w(ks[11], (inter,), inter)
    p["Q_gamma"] = jnp.zeros((inter,), jnp.float32)
    p["Q_beta"]  = jnp.zeros((inter,), jnp.float32)
    kg = jax.random.split(ks[0], 4)
    p["cg_w1"] = w(kg[0], (inter, inter), inter)
    p["cg_b1"] = w(kg[1], (inter,), inter)
    p["cg_w2"] = w(kg[2], (inter, inter), inter)
    p["cg_b2"] = w(kg[3], (inter,), inter)
    return p


# ---------------------------------------------------------------- reference (pure JAX)
def reference_forward(params, detect, aim, inter):
    B, Cd, Hd, Wd = detect.shape
    _, Ca, Ha, Wa = aim.shape
    Nd, Na = Hd * Wd, Ha * Wa
    det = jnp.transpose(detect.reshape(B, Cd, Nd), (0, 2, 1))
    am = jnp.transpose(aim.reshape(B, Ca, Na), (0, 2, 1))
    c1 = lambda x, w, b: jnp.einsum("bnc,oc->bno", x, w) + b
    d_x = c1(det, params["g1_w"], params["g1_b"])
    a_x = c1(am, params["g2_w"], params["g2_b"])
    th = c1(am, params["theta_w"], params["theta_b"])
    ph = c1(det, params["phi_w"], params["phi_b"])
    f = jnp.einsum("bnc,bmc->bnm", th, ph)
    non_aim_pre = jnp.einsum("bnm,bmc->bnc", f / Nd, d_x)
    non_det_pre = jnp.einsum("bmn,bnc->bmc", jnp.transpose(f, (0, 2, 1)) / Na, a_x)

    def bn(x, g, bta):
        m = jnp.mean(x, axis=(0, 1), keepdims=True)
        v = jnp.mean((x - m) ** 2, axis=(0, 1), keepdims=True)
        return (x - m) / jnp.sqrt(v + 1e-5) * g + bta

    non_aim = bn(c1(non_aim_pre, params["W_w"], params["W_b"]),
                 params["W_gamma"], params["W_beta"]) + a_x
    non_det = bn(c1(non_det_pre, params["Q_w"], params["Q_b"]),
                 params["Q_gamma"], params["Q_beta"]) + d_x

    def mlp(p):
        h = jnp.maximum(p @ params["cg_w1"].T + params["cg_b1"], 0.0)
        return h @ params["cg_w2"].T + params["cg_b2"]

    s = jax.nn.sigmoid(mlp(jnp.mean(non_aim, axis=1)) + mlp(jnp.max(non_aim, axis=1)))
    act_aim = non_aim * s[:, None, :]
    act_det = non_det * s[:, None, :]
    act_aim = jnp.transpose(act_aim, (0, 2, 1)).reshape(B, inter, Ha, Wa)
    act_det = jnp.transpose(act_det, (0, 2, 1)).reshape(B, inter, Hd, Wd)
    return act_det, act_aim


# ---------------------------------------------------------------- test
if __name__ == "__main__":
    inplanes = 16
    num_class = 10           # unused in forward (matches the PyTorch module)
    inter = max(inplanes // 4, 1)

    B, Hd, Wd = 2, 8, 8
    Ha, Wa = 8, 8

    key = jax.random.PRNGKey(0)
    k_det, k_aim, k_par = jax.random.split(key, 3)
    detect = jax.random.normal(k_det, (B, inplanes, Hd, Wd), jnp.float32)
    aim = jax.random.normal(k_aim, (B, 32, Ha, Wa), jnp.float32)

    # 1) PyTorch-faithful init (BN gamma/beta = 0, as in nn.init.constant_)
    params = init_params(k_par, inplanes, inter)
    act_det, act_aim = cos_attn_no_forward(params, detect, aim)
    act_det = jax.block_until_ready(act_det)
    act_aim = jax.block_until_ready(act_aim)
    ref_det, ref_aim = reference_forward(params, detect, aim, inter)
    assert act_det.shape == (B, inter, Hd, Wd)
    assert act_aim.shape == (B, inter, Ha, Wa)
    assert jnp.allclose(act_det, ref_det, rtol=1e-3, atol=1e-3)
    assert jnp.allclose(act_aim, ref_aim, rtol=1e-3, atol=1e-3)

    # 2) Nonzero BN gamma/beta to actually exercise the BN code path
    params2 = dict(params)
    kg = jax.random.split(jax.random.PRNGKey(1), 4)
    params2["W_gamma"] = jax.random.normal(kg[0], (inter,), jnp.float32)
    params2["W_beta"] = jax.random.normal(kg[1], (inter,), jnp.float32)
    params2["Q_gamma"] = jax.random.normal(kg[2], (inter,), jnp.float32)
    params2["Q_beta"] = jax.random.normal(kg[3], (inter,), jnp.float32)
    act_det2, act_aim2 = cos_attn_no_forward(params2, detect, aim)
    act_det2 = jax.block_until_ready(act_det2)
    act_aim2 = jax.block_until_ready(act_aim2)
    ref_det2, ref_aim2 = reference_forward(params2, detect, aim, inter)
    assert jnp.allclose(act_det2, ref_det2, rtol=1e-3, atol=1e-3)
    assert jnp.allclose(act_aim2, ref_aim2, rtol=1e-3, atol=1e-3)

    print("KERNEL_OK")
</pallas_src>

<mosaic_0001>
module attributes {stable_mosaic.version = 11 : i64} {
  func.func @cos_attn_fused_kernel(%arg0: i32, %arg1: memref<2x16x64xf32, #tpu.memory_space<vmem>>, %arg2: memref<2x32x64xf32, #tpu.memory_space<vmem>>, %arg3: memref<8x16xf32, #tpu.memory_space<vmem>>, %arg4: memref<8x1xf32, #tpu.memory_space<vmem>>, %arg5: memref<8x32xf32, #tpu.memory_space<vmem>>, %arg6: memref<8x1xf32, #tpu.memory_space<vmem>>, %arg7: memref<4x4xf32, #tpu.memory_space<vmem>>, %arg8: memref<4x1xf32, #tpu.memory_space<vmem>>, %arg9: memref<4x1xf32, #tpu.memory_space<vmem>>, %arg10: memref<4x1xf32, #tpu.memory_space<vmem>>, %arg11: memref<4x4xf32, #tpu.memory_space<vmem>>, %arg12: memref<4x1xf32, #tpu.memory_space<vmem>>, %arg13: memref<4x1xf32, #tpu.memory_space<vmem>>, %arg14: memref<4x1xf32, #tpu.memory_space<vmem>>, %arg15: memref<4x4xf32, #tpu.memory_space<vmem>>, %arg16: memref<1x4xf32, #tpu.memory_space<vmem>>, %arg17: memref<4x4xf32, #tpu.memory_space<vmem>>, %arg18: memref<1x4xf32, #tpu.memory_space<vmem>>, %arg19: memref<2x4x64xf32, #tpu.memory_space<vmem>>, %arg20: memref<2x4x64xf32, #tpu.memory_space<vmem>>, %arg21: memref<2x4x64xf32, #tpu.memory_space<vmem>>, %arg22: memref<2x4x64xf32, #tpu.memory_space<vmem>>) attributes {dimension_semantics = [#tpu.dimension_semantics<arbitrary>], iteration_bounds = array<i64: 1>, scalar_prefetch = 0 : i64, scratch_operands = 2 : i64, tpu.core_type = #tpu.core_type<tc>, window_params = [{pipeline_mode = #tpu.pipeline_mode<synchronous>, transform_indices = @transform_0, window_bounds = array<i64: 2, 16, 64>}, {pipeline_mode = #tpu.pipeline_mode<synchronous>, transform_indices = @transform_1, window_bounds = array<i64: 2, 32, 64>}, {pipeline_mode = #tpu.pipeline_mode<synchronous>, transform_indices = @transform_2, window_bounds = array<i64: 8, 16>}, {pipeline_mode = #tpu.pipeline_mode<synchronous>, transform_indices = @transform_3, window_bounds = array<i64: 8, 1>}, {pipeline_mode = #tpu.pipeline_mode<synchronous>, transform_indices = @transform_4, window_bounds = array<i64: 8, 32>}, {pipeline_mode = #tpu.pipeline_mode<synchronous>, transform_indices = @transform_5, window_bounds = array<i64: 8, 1>}, {pipeline_mode = #tpu.pipeline_mode<synchronous>, transform_indices = @transform_6, window_bounds = array<i64: 4, 4>}, {pipeline_mode = #tpu.pipeline_mode<synchronous>, transform_indices = @transform_7, window_bounds = array<i64: 4, 1>}, {pipeline_mode = #tpu.pipeline_mode<synchronous>, transform_indices = @transform_8, window_bounds = array<i64: 4, 1>}, {pipeline_mode = #tpu.pipeline_mode<synchronous>, transform_indices = @transform_9, window_bounds = array<i64: 4, 1>}, {pipeline_mode = #tpu.pipeline_mode<synchronous>, transform_indices = @transform_10, window_bounds = array<i64: 4, 4>}, {pipeline_mode = #tpu.pipeline_mode<synchronous>, transform_indices = @transform_11, window_bounds = array<i64: 4, 1>}, {pipeline_mode = #tpu.pipeline_mode<synchronous>, transform_indices = @transform_12, window_bounds = array<i64: 4, 1>}, {pipeline_mode = #tpu.pipeline_mode<synchronous>, transform_indices = @transform_13, window_bounds = array<i64: 4, 1>}, {pipeline_mode = #tpu.pipeline_mode<synchronous>, transform_indices = @transform_14, window_bounds = array<i64: 4, 4>}, {pipeline_mode = #tpu.pipeline_mode<synchronous>, transform_indices = @transform_15, window_bounds = array<i64: 1, 4>}, {pipeline_mode = #tpu.pipeline_mode<synchronous>, transform_indices = @transform_16, window_bounds = array<i64: 4, 4>}, {pipeline_mode = #tpu.pipeline_mode<synchronous>, transform_indices = @transform_17, window_bounds = array<i64: 1, 4>}, {pipeline_mode = #tpu.pipeline_mode<synchronous>, transform_indices = @transform_18, window_bounds = array<i64: 2, 4, 64>}, {pipeline_mode = #tpu.pipeline_mode<synchronous>, transform_indices = @transform_19, window_bounds = array<i64: 2, 4, 64>}]} {
    %c0 = arith.constant 0 : index
    %c0_0 = arith.constant 0 : index
    %0 = vector.load %arg3[%c0, %c0_0] : memref<8x16xf32, #tpu.memory_space<vmem>>, vector<8x16xf32>
    %c0_1 = arith.constant 0 : index
    %c0_2 = arith.constant 0 : index
    %1 = vector.load %arg4[%c0_1, %c0_2] : memref<8x1xf32, #tpu.memory_space<vmem>>, vector<8x1xf32>
    %c0_3 = arith.constant 0 : index
    %c0_4 = arith.constant 0 : index
    %2 = vector.load %arg5[%c0_3, %c0_4] : memref<8x32xf32, #tpu.memory_space<vmem>>, vector<8x32xf32>
    %c0_5 = arith.constant 0 : index
    %c0_6 = arith.constant 0 : index
    %3 = vector.load %arg6[%c0_5, %c0_6] : memref<8x1xf32, #tpu.memory_space<vmem>>, vector<8x1xf32>
    %c0_7 = arith.constant 0 : index
    %c0_8 = arith.constant 0 : index
    %4 = vector.load %arg7[%c0_7, %c0_8] : memref<4x4xf32, #tpu.memory_space<vmem>>, vector<4x4xf32>
    %c0_9 = arith.constant 0 : index
    %c0_10 = arith.constant 0 : index
    %5 = vector.load %arg8[%c0_9, %c0_10] : memref<4x1xf32, #tpu.memory_space<vmem>>, vector<4x1xf32>
    %c0_11 = arith.constant 0 : index
    %c0_12 = arith.constant 0 : index
    %6 = vector.load %arg11[%c0_11, %c0_12] : memref<4x4xf32, #tpu.memory_space<vmem>>, vector<4x4xf32>
    %c0_13 = arith.constant 0 : index
    %c0_14 = arith.constant 0 : index
    %7 = vector.load %arg12[%c0_13, %c0_14] : memref<4x1xf32, #tpu.memory_space<vmem>>, vector<4x1xf32>
    %c0_15 = arith.constant 0 : index
    %c0_16 = arith.constant 0 : index
    %c0_17 = arith.constant 0 : index
    %8 = vector.load %arg1[%c0_15, %c0_16, %c0_17] : memref<2x16x64xf32, #tpu.memory_space<vmem>>, vector<1x16x64xf32>
    %9 = vector.shape_cast %8 : vector<1x16x64xf32> to vector<16x64xf32>
    %c0_18 = arith.constant 0 : index
    %c0_19 = arith.constant 0 : index
    %c0_20 = arith.constant 0 : index
    %10 = vector.load %arg2[%c0_18, %c0_19, %c0_20] : memref<2x32x64xf32, #tpu.memory_space<vmem>>, vector<1x32x64xf32>
    %11 = vector.shape_cast %10 : vector<1x32x64xf32> to vector<32x64xf32>
    %cst = arith.constant dense<0.000000e+00> : vector<8x64xf32>
    %12 = tpu.matmul %0, %9, %cst {dimension_numbers = #tpu.dot_dimension_numbers<[1], [0], [0], [1], [0, 0, 1, 1], [], []>} : vector<8x16xf32>, vector<16x64xf32>, vector<8x64xf32> -> vector<8x64xf32>
    %13 = vector.broadcast %1 : vector<8x1xf32> to vector<8x64xf32>
    %14 = arith.addf %12, %13 : vector<8x64xf32>
    %cst_21 = arith.constant dense<0.000000e+00> : vector<8x64xf32>
    %15 = tpu.matmul %2, %11, %cst_21 {dimension_numbers = #tpu.dot_dimension_numbers<[1], [0], [0], [1], [0, 0, 1, 1], [], []>} : vector<8x32xf32>, vector<32x64xf32>, vector<8x64xf32> -> vector<8x64xf32>
    %16 = vector.broadcast %3 : vector<8x1xf32> to vector<8x64xf32>
    %17 = arith.addf %15, %16 : vector<8x64xf32>
    %18 = vector.extract_strided_slice %14 {offsets = [0, 0], sizes = [4, 64], strides = [1, 1]} : vector<8x64xf32> to vector<4x64xf32>
    %19 = vector.extract_strided_slice %14 {offsets = [4, 0], sizes = [4, 64], strides = [1, 1]} : vector<8x64xf32> to vector<4x64xf32>
    %20 = vector.extract_strided_slice %17 {offsets = [0, 0], sizes = [4, 64], strides = [1, 1]} : vector<8x64xf32> to vector<4x64xf32>
    %21 = vector.extract_strided_slice %17 {offsets = [4, 0], sizes = [4, 64], strides = [1, 1]} : vector<8x64xf32> to vector<4x64xf32>
    %cst_22 = arith.constant dense<0.000000e+00> : vector<64x64xf32>
    %22 = tpu.matmul %20, %18, %cst_22 {dimension_numbers = #tpu.dot_dimension_numbers<[0], [0], [1], [1], [0, 1, 1, 1], [], []>} : vector<4x64xf32>, vector<4x64xf32>, vector<64x64xf32> -> vector<64x64xf32>
    %cst_23 = arith.constant dense<0.000000e+00> : vector<4x64xf32>
    %23 = tpu.matmul %19, %22, %cst_23 {dimension_numbers = #tpu.dot_dimension_numbers<[1], [1], [0], [0], [0, 0, 1, 0], [], []>} : vector<4x64xf32>, vector<64x64xf32>, vector<4x64xf32> -> vector<4x64xf32>
    %cst_24 = arith.constant 1.562500e-02 : f32
    %24 = vector.broadcast %cst_24 : f32 to vector<4x64xf32>
    %25 = arith.mulf %23, %24 : vector<4x64xf32>
    %cst_25 = arith.constant dense<0.000000e+00> : vector<4x64xf32>
    %26 = tpu.matmul %21, %22, %cst_25 {dimension_numbers = #tpu.dot_dimension_numbers<[1], [0], [0], [1], [0, 0, 1, 1], [], []>} : vector<4x64xf32>, vector<64x64xf32>, vector<4x64xf32> -> vector<4x64xf32>
    %cst_26 = arith.constant 1.562500e-02 : f32
    %27 = vector.broadcast %cst_26 : f32 to vector<4x64xf32>
    %28 = arith.mulf %26, %27 : vector<4x64xf32>
    %cst_27 = arith.constant dense<0.000000e+00> : vector<4x64xf32>
    %29 = tpu.matmul %4, %25, %cst_27 {dimension_numbers = #tpu.dot_dimension_numbers<[1], [0], [0], [1], [0, 0, 1, 1], [], []>} : vector<4x4xf32>, vector<4x64xf32>, vector<4x64xf32> -> vector<4x64xf32>
    %30 = vector.broadcast %5 : vector<4x1xf32> to vector<4x64xf32>
    %31 = arith.addf %29, %30 : vector<4x64xf32>
    %c0_28 = arith.constant 0 : index
    %c0_29 = arith.constant 0 : index
    %c0_30 = arith.constant 0 : index
    %32 = vector.load %arg20[%c0_28, %c0_29, %c0_30] : memref<2x4x64xf32, #tpu.memory_space<vmem>>, vector<1x4x64xf32>
    %33 = vector.shape_cast %32 : vector<1x4x64xf32> to vector<4x64xf32>
    %34 = vector.shape_cast %31 : vector<4x64xf32> to vector<1x4x64xf32>
    tpu.vector_store %arg20[%c0_28, %c0_29, %c0_30], %34 {strides = array<i32>} : memref<2x4x64xf32, #tpu.memory_space<vmem>>, vector<1x4x64xf32>,
    %cst_31 = arith.constant dense<0.000000e+00> : vector<4x64xf32>
    %35 = tpu.matmul %6, %28, %cst_31 {dimension_numbers = #tpu.dot_dimension_numbers<[1], [0], [0], [1], [0, 0, 1, 1], [], []>} : vector<4x4xf32>, vector<4x64xf32>, vector<4x64xf32> -> vector<4x64xf32>
    %36 = vector.broadcast %7 : vector<4x1xf32> to vector<4x64xf32>
    %37 = arith.addf %35, %36 : vector<4x64xf32>
    %c0_32 = arith.constant 0 : index
    %c0_33 = arith.constant 0 : index
    %c0_34 = arith.constant 0 : index
    %38 = vector.load %arg19[%c0_32, %c0_33, %c0_34] : memref<2x4x64xf32, #tpu.memory_space<vmem>>, vector<1x4x64xf32>
    %39 = vector.shape_cast %38 : vector<1x4x64xf32> to vector<4x64xf32>
    %40 = vector.shape_cast %37 : vector<4x64xf32> to vector<1x4x64xf32>
    tpu.vector_store %arg19[%c0_32, %c0_33, %c0_34], %40 {strides = array<i32>} : memref<2x4x64xf32, #tpu.memory_space<vmem>>, vector<1x4x64xf32>,
    %c0_35 = arith.constant 0 : index
    %c0_36 = arith.constant 0 : index
    %c0_37 = arith.constant 0 : index
    %41 = vector.load %arg21[%c0_35, %c0_36, %c0_37] : memref<2x4x64xf32, #tpu.memory_space<vmem>>, vector<1x4x64xf32>
    %42 = vector.shape_cast %41 : vector<1x4x64xf32> to vector<4x64xf32>
    %43 = vector.shape_cast %21 : vector<4x64xf32> to vector<1x4x64xf32>
    tpu.vector_store %arg21[%c0_35, %c0_36, %c0_37], %43 {strides = array<i32>} : memref<2x4x64xf32, #tpu.memory_space<vmem>>, vector<1x4x64xf32>,
    %c0_38 = arith.constant 0 : index
    %c0_39 = arith.constant 0 : index
    %c0_40 = arith.constant 0 : index
    %44 = vector.load %arg22[%c0_38, %c0_39, %c0_40] : memref<2x4x64xf32, #tpu.memory_space<vmem>>, vector<1x4x64xf32>
    %45 = vector.shape_cast %44 : vector<1x4x64xf32> to vector<4x64xf32>
    %46 = vector.shape_cast %19 : vector<4x64xf32> to vector<1x4x64xf32>
    tpu.vector_store %arg22[%c0_38, %c0_39, %c0_40], %46 {strides = array<i32>} : memref<2x4x64xf32, #tpu.memory_space<vmem>>, vector<1x4x64xf32>,
    %c1 = arith.constant 1 : index
    %c0_41 = arith.constant 0 : index
    %c0_42 = arith.constant 0 : index
    %47 = vector.load %arg1[%c1, %c0_41, %c0_42] : memref<2x16x64xf32, #tpu.memory_space<vmem>>, vector<1x16x64xf32>
    %48 = vector.shape_cast %47 : vector<1x16x64xf32> to vector<16x64xf32>
    %c1_43 = arith.constant 1 : index
    %c0_44 = arith.constant 0 : index
    %c0_45 = arith.constant 0 : index
    %49 = vector.load %arg2[%c1_43, %c0_44, %c0_45] : memref<2x32x64xf32, #tpu.memory_space<vmem>>, vector<1x32x64xf32>
    %50 = vector.shape_cast %49 : vector<1x32x64xf32> to vector<32x64xf32>
    %cst_46 = arith.constant dense<0.000000e+00> : vector<8x64xf32>
    %51 = tpu.matmul %0, %48, %cst_46 {dimension_numbers = #tpu.dot_dimension_numbers<[1], [0], [0], [1], [0, 0, 1, 1], [], []>} : vector<8x16xf32>, vector<16x64xf32>, vector<8x64xf32> -> vector<8x64xf32>
    %52 = vector.broadcast %1 : vector<8x1xf32> to vector<8x64xf32>
    %53 = arith.addf %51, %52 : vector<8x64xf32>
    %cst_47 = arith.constant dense<0.000000e+00> : vector<8x64xf32>
    %54 = tpu.matmul %2, %50, %cst_47 {dimension_numbers = #tpu.dot_dimension_numbers<[1], [0], [0], [1], [0, 0, 1, 1], [], []>} : vector<8x32xf32>, vector<32x64xf32>, vector<8x64xf32> -> vector<8x64xf32>
    %55 = vector.broadcast %3 : vector<8x1xf32> to vector<8x64xf32>
    %56 = arith.addf %54, %55 : vector<8x64xf32>
    %57 = vector.extract_strided_slice %53 {offsets = [0, 0], sizes = [4, 64], strides = [1, 1]} : vector<8x64xf32> to vector<4x64xf32>
    %58 = vector.extract_strided_slice %53 {offsets = [4, 0], sizes = [4, 64], strides = [1, 1]} : vector<8x64xf32> to vector<4x64xf32>
    %59 = vector.extract_strided_slice %56 {offsets = [0, 0], sizes = [4, 64], strides = [1, 1]} : vector<8x64xf32> to vector<4x64xf32>
    %60 = vector.extract_strided_slice %56 {offsets = [4, 0], sizes = [4, 64], strides = [1, 1]} : vector<8x64xf32> to vector<4x64xf32>
    %cst_48 = arith.constant dense<0.000000e+00> : vector<64x64xf32>
    %61 = tpu.matmul %59, %57, %cst_48 {dimension_numbers = #tpu.dot_dimension_numbers<[0], [0], [1], [1], [0, 1, 1, 1], [], []>} : vector<4x64xf32>, vector<4x64xf32>, vector<64x64xf32> -> vector<64x64xf32>
    %cst_49 = arith.constant dense<0.000000e+00> : vector<4x64xf32>
    %62 = tpu.matmul %58, %61, %cst_49 {dimension_numbers = #tpu.dot_dimension_numbers<[1], [1], [0], [0], [0, 0, 1, 0], [], []>} : vector<4x64xf32>, vector<64x64xf32>, vector<4x64xf32> -> vector<4x64xf32>
    %cst_50 = arith.constant 1.562500e-02 : f32
    %63 = vector.broadcast %cst_50 : f32 to vector<4x64xf32>
    %64 = arith.mulf %62, %63 : vector<4x64xf32>
    %cst_51 = arith.constant dense<0.000000e+00> : vector<4x64xf32>
    %65 = tpu.matmul %60, %61, %cst_51 {dimension_numbers = #tpu.dot_dimension_numbers<[1], [0], [0], [1], [0, 0, 1, 1], [], []>} : vector<4x64xf32>, vector<64x64xf32>, vector<4x64xf32> -> vector<4x64xf32>
    %cst_52 = arith.constant 1.562500e-02 : f32
    %66 = vector.broadcast %cst_52 : f32 to vector<4x64xf32>
    %67 = arith.mulf %65, %66 : vector<4x64xf32>
    %cst_53 = arith.constant dense<0.000000e+00> : vector<4x64xf32>
    %68 = tpu.matmul %4, %64, %cst_53 {dimension_numbers = #tpu.dot_dimension_numbers<[1], [0], [0], [1], [0, 0, 1, 1], [], []>} : vector<4x4xf32>, vector<4x64xf32>, vector<4x64xf32> -> vector<4x64xf32>
    %69 = vector.broadcast %5 : vector<4x1xf32> to vector<4x64xf32>
    %70 = arith.addf %68, %69 : vector<4x64xf32>
    %c1_54 = arith.constant 1 : index
    %c0_55 = arith.constant 0 : index
    %c0_56 = arith.constant 0 : index
    %71 = vector.load %arg20[%c1_54, %c0_55, %c0_56] : memref<2x4x64xf32, #tpu.memory_space<vmem>>, vector<1x4x64xf32>
    %72 = vector.shape_cast %71 : vector<1x4x64xf32> to vector<4x64xf32>
    %73 = vector.shape_cast %70 : vector<4x64xf32> to vector<1x4x64xf32>
    tpu.vector_store %arg20[%c1_54, %c0_55, %c0_56], %73 {strides = array<i32>} : memref<2x4x64xf32, #tpu.memory_space<vmem>>, vector<1x4x64xf32>,
    %cst_57 = arith.constant dense<0.000000e+00> : vector<4x64xf32>
    %74 = tpu.matmul %6, %67, %cst_57 {dimension_numbers = #tpu.dot_dimension_numbers<[1], [0], [0], [1], [0, 0, 1, 1], [], []>} : vector<4x4xf32>, vector<4x64xf32>, vector<4x64xf32> -> vector<4x64xf32>
    %75 = vector.broadcast %7 : vector<4x1xf32> to vector<4x64xf32>
    %76 = arith.addf %74, %75 : vector<4x64xf32>
    %c1_58 = arith.constant 1 : index
    %c0_59 = arith.constant 0 : index
    %c0_60 = arith.constant 0 : index
    %77 = vector.load %arg19[%c1_58, %c0_59, %c0_60] : memref<2x4x64xf32, #tpu.memory_space<vmem>>, vector<1x4x64xf32>
    %78 = vector.shape_cast %77 : vector<1x4x64xf32> to vector<4x64xf32>
    %79 = vector.shape_cast %76 : vector<4x64xf32> to vector<1x4x64xf32>
    tpu.vector_store %arg19[%c1_58, %c0_59, %c0_60], %79 {strides = array<i32>} : memref<2x4x64xf32, #tpu.memory_space<vmem>>, vector<1x4x64xf32>,
    %c1_61 = arith.constant 1 : index
    %c0_62 = arith.constant 0 : index
    %c0_63 = arith.constant 0 : index
    %80 = vector.load %arg21[%c1_61, %c0_62, %c0_63] : memref<2x4x64xf32, #tpu.memory_space<vmem>>, vector<1x4x64xf32>
    %81 = vector.shape_cast %80 : vector<1x4x64xf32> to vector<4x64xf32>
    %82 = vector.shape_cast %60 : vector<4x64xf32> to vector<1x4x64xf32>
    tpu.vector_store %arg21[%c1_61, %c0_62, %c0_63], %82 {strides = array<i32>} : memref<2x4x64xf32, #tpu.memory_space<vmem>>, vector<1x4x64xf32>,
    %c1_64 = arith.constant 1 : index
    %c0_65 = arith.constant 0 : index
    %c0_66 = arith.constant 0 : index
    %83 = vector.load %arg22[%c1_64, %c0_65, %c0_66] : memref<2x4x64xf32, #tpu.memory_space<vmem>>, vector<1x4x64xf32>
    %84 = vector.shape_cast %83 : vector<1x4x64xf32> to vector<4x64xf32>
    %85 = vector.shape_cast %58 : vector<4x64xf32> to vector<1x4x64xf32>
    tpu.vector_store %arg22[%c1_64, %c0_65, %c0_66], %85 {strides = array<i32>} : memref<2x4x64xf32, #tpu.memory_space<vmem>>, vector<1x4x64xf32>,
    %c0_67 = arith.constant 0 : index
    %c0_68 = arith.constant 0 : index
    %86 = vector.load %arg9[%c0_67, %c0_68] : memref<4x1xf32, #tpu.memory_space<vmem>>, vector<4x1xf32>
    %c0_69 = arith.constant 0 : index
    %c0_70 = arith.constant 0 : index
    %87 = vector.load %arg10[%c0_69, %c0_70] : memref<4x1xf32, #tpu.memory_space<vmem>>, vector<4x1xf32>
    %c0_71 = arith.constant 0 : index
    %c0_72 = arith.constant 0 : index
    %c0_73 = arith.constant 0 : index
    %88 = vector.load %arg21[%c0_71, %c0_72, %c0_73] : memref<2x4x64xf32, #tpu.memory_space<vmem>>, vector<2x4x64xf32>
    %c0_74 = arith.constant 0 : index
    %c0_75 = arith.constant 0 : index
    %c0_76 = arith.constant 0 : index
    %89 = vector.load %arg20[%c0_74, %c0_75, %c0_76] : memref<2x4x64xf32, #tpu.memory_space<vmem>>, vector<2x4x64xf32>
    %cst_77 = arith.constant dense<0.000000e+00> : vector<4xf32>
    %90 = vector.multi_reduction <add>, %89, %cst_77 [0, 2] : vector<2x4x64xf32> to vector<4xf32>
    %91 = vector.shape_cast %90 : vector<4xf32> to vector<1x4x1xf32>
    %cst_78 = arith.constant 1.280000e+02 : f32
    %92 = vector.broadcast %cst_78 : f32 to vector<1x4x1xf32>
    %93 = arith.divf %91, %92 : vector<1x4x1xf32>
    %94 = vector.broadcast %93 : vector<1x4x1xf32> to vector<2x4x64xf32>
    %95 = arith.subf %89, %94 : vector<2x4x64xf32>
    %96 = arith.mulf %95, %95 : vector<2x4x64xf32>
    %cst_79 = arith.constant dense<0.000000e+00> : vector<4xf32>
    %97 = vector.multi_reduction <add>, %96, %cst_79 [0, 2] : vector<2x4x64xf32> to vector<4xf32>
    %98 = vector.shape_cast %97 : vector<4xf32> to vector<1x4x1xf32>
    %cst_80 = arith.constant 1.280000e+02 : f32
    %99 = vector.broadcast %cst_80 : f32 to vector<1x4x1xf32>
    %100 = arith.divf %98, %99 : vector<1x4x1xf32>
    %cst_81 = arith.constant 9.99999974E-6 : f32
    %101 = vector.broadcast %cst_81 : f32 to vector<1x4x1xf32>
    %102 = arith.addf %100, %101 : vector<1x4x1xf32>
    %103 = math.rsqrt %102 : vector<1x4x1xf32>
    %104 = vector.broadcast %103 : vector<1x4x1xf32> to vector<2x4x64xf32>
    %105 = arith.mulf %95, %104 : vector<2x4x64xf32>
    %106 = vector.shape_cast %86 : vector<4x1xf32> to vector<1x4x1xf32>
    %107 = vector.broadcast %106 : vector<1x4x1xf32> to vector<2x4x64xf32>
    %108 = arith.mulf %105, %107 : vector<2x4x64xf32>
    %109 = vector.shape_cast %87 : vector<4x1xf32> to vector<1x4x1xf32>
    %110 = vector.broadcast %109 : vector<1x4x1xf32> to vector<2x4x64xf32>
    %111 = arith.addf %108, %110 : vector<2x4x64xf32>
    %112 = arith.addf %111, %88 : vector<2x4x64xf32>
    %c0_82 = arith.constant 0 : index
    %c0_83 = arith.constant 0 : index
    %113 = vector.load %arg13[%c0_82, %c0_83] : memref<4x1xf32, #tpu.memory_space<vmem>>, vector<4x1xf32>
    %c0_84 = arith.constant 0 : index
    %c0_85 = arith.constant 0 : index
    %114 = vector.load %arg14[%c0_84, %c0_85] : memref<4x1xf32, #tpu.memory_space<vmem>>, vector<4x1xf32>
    %c0_86 = arith.constant 0 : index
    %c0_87 = arith.constant 0 : index
    %c0_88 = arith.constant 0 : index
    %115 = vector.load %arg22[%c0_86, %c0_87, %c0_88] : memref<2x4x64xf32, #tpu.memory_space<vmem>>, vector<2x4x64xf32>
    %c0_89 = arith.constant 0 : index
    %c0_90 = arith.constant 0 : index
    %c0_91 = arith.constant 0 : index
    %116 = vector.load %arg19[%c0_89, %c0_90, %c0_91] : memref<2x4x64xf32, #tpu.memory_space<vmem>>, vector<2x4x64xf32>
    %cst_92 = arith.constant dense<0.000000e+00> : vector<4xf32>
    %117 = vector.multi_reduction <add>, %116, %cst_92 [0, 2] : vector<2x4x64xf32> to vector<4xf32>
    %118 = vector.shape_cast %117 : vector<4xf32> to vector<1x4x1xf32>
    %cst_93 = arith.constant 1.280000e+02 : f32
    %119 = vector.broadcast %cst_93 : f32 to vector<1x4x1xf32>
    %120 = arith.divf %118, %119 : vector<1x4x1xf32>
    %121 = vector.broadcast %120 : vector<1x4x1xf32> to vector<2x4x64xf32>
    %122 = arith.subf %116, %121 : vector<2x4x64xf32>
    %123 = arith.mulf %122, %122 : vector<2x4x64xf32>
    %cst_94 = arith.constant dense<0.000000e+00> : vector<4xf32>
    %124 = vector.multi_reduction <add>, %123, %cst_94 [0, 2] : vector<2x4x64xf32> to vector<4xf32>
    %125 = vector.shape_cast %124 : vector<4xf32> to vector<1x4x1xf32>
    %cst_95 = arith.constant 1.280000e+02 : f32
    %126 = vector.broadcast %cst_95 : f32 to vector<1x4x1xf32>
    %127 = arith.divf %125, %126 : vector<1x4x1xf32>
    %cst_96 = arith.constant 9.99999974E-6 : f32
    %128 = vector.broadcast %cst_96 : f32 to vector<1x4x1xf32>
    %129 = arith.addf %127, %128 : vector<1x4x1xf32>
    %130 = math.rsqrt %129 : vector<1x4x1xf32>
    %131 = vector.broadcast %130 : vector<1x4x1xf32> to vector<2x4x64xf32>
    %132 = arith.mulf %122, %131 : vector<2x4x64xf32>
    %133 = vector.shape_cast %113 : vector<4x1xf32> to vector<1x4x1xf32>
    %134 = vector.broadcast %133 : vector<1x4x1xf32> to vector<2x4x64xf32>
    %135 = arith.mulf %132, %134 : vector<2x4x64xf32>
    %136 = vector.shape_cast %114 : vector<4x1xf32> to vector<1x4x1xf32>
    %137 = vector.broadcast %136 : vector<1x4x1xf32> to vector<2x4x64xf32>
    %138 = arith.addf %135, %137 : vector<2x4x64xf32>
    %139 = arith.addf %138, %115 : vector<2x4x64xf32>
    %cst_97 = arith.constant dense<0.000000e+00> : vector<2x4xf32>
    %140 = vector.multi_reduction <add>, %112, %cst_97 [2] : vector<2x4x64xf32> to vector<2x4xf32>
    %cst_98 = arith.constant 6.400000e+01 : f32
    %141 = vector.broadcast %cst_98 : f32 to vector<2x4xf32>
    %142 = arith.divf %140, %141 : vector<2x4xf32>
    %cst_99 = arith.constant dense<0xFF800000> : vector<2x4xf32>
    %143 = vector.multi_reduction <maximumf>, %112, %cst_99 [2] : vector<2x4x64xf32> to vector<2x4xf32>
    %144 = tpu.concatenate %142, %143 in 0 : vector<2x4xf32>, vector<2x4xf32> -> vector<4x4xf32>
    %c0_100 = arith.constant 0 : index
    %c0_101 = arith.constant 0 : index
    %145 = vector.load %arg15[%c0_100, %c0_101] : memref<4x4xf32, #tpu.memory_space<vmem>>, vector<4x4xf32>
    %cst_102 = arith.constant dense<0.000000e+00> : vector<4x4xf32>
    %146 = tpu.matmul %144, %145, %cst_102 {dimension_numbers = #tpu.dot_dimension_numbers<[1], [0], [0], [1], [0, 0, 1, 1], [], []>} : vector<4x4xf32>, vector<4x4xf32>, vector<4x4xf32> -> vector<4x4xf32>
    %c0_103 = arith.constant 0 : index
    %c0_104 = arith.constant 0 : index
    %147 = vector.load %arg16[%c0_103, %c0_104] : memref<1x4xf32, #tpu.memory_space<vmem>>, vector<1x4xf32>
    %148 = vector.broadcast %147 : vector<1x4xf32> to vector<4x4xf32>
    %149 = arith.addf %146, %148 : vector<4x4xf32>
    %cst_105 = arith.constant 0.000000e+00 : f32
    %150 = vector.broadcast %cst_105 : f32 to vector<4x4xf32>
    %151 = arith.maximumf %149, %150 : vector<4x4xf32>
    %c0_106 = arith.constant 0 : index
    %c0_107 = arith.constant 0 : index
    %152 = vector.load %arg17[%c0_106, %c0_107] : memref<4x4xf32, #tpu.memory_space<vmem>>, vector<4x4xf32>
    %cst_108 = arith.constant dense<0.000000e+00> : vector<4x4xf32>
    %153 = tpu.matmul %151, %152, %cst_108 {dimension_numbers = #tpu.dot_dimension_numbers<[1], [0], [0], [1], [0, 0, 1, 1], [], []>} : vector<4x4xf32>, vector<4x4xf32>, vector<4x4xf32> -> vector<4x4xf32>
    %c0_109 = arith.constant 0 : index
    %c0_110 = arith.constant 0 : index
    %154 = vector.load %arg18[%c0_109, %c0_110] : memref<1x4xf32, #tpu.memory_space<vmem>>, vector<1x4xf32>
    %155 = vector.broadcast %154 : vector<1x4xf32> to vector<4x4xf32>
    %156 = arith.addf %153, %155 : vector<4x4xf32>
    %157 = vector.extract_strided_slice %156 {offsets = [0, 0], sizes = [2, 4], strides = [1, 1]} : vector<4x4xf32> to vector<2x4xf32>
    %158 = vector.extract_strided_slice %156 {offsets = [2, 0], sizes = [2, 4], strides = [1, 1]} : vector<4x4xf32> to vector<2x4xf32>
    %159 = arith.addf %157, %158 : vector<2x4xf32>
    %160 = arith.negf %159 : vector<2x4xf32>
    %161 = math.exp %160 : vector<2x4xf32>
    %cst_111 = arith.constant 1.000000e+00 : f32
    %162 = vector.broadcast %cst_111 : f32 to vector<2x4xf32>
    %163 = arith.addf %162, %161 : vector<2x4xf32>
    %164 = arith.divf %162, %163 : vector<2x4xf32>
    %165 = vector.shape_cast %164 : vector<2x4xf32> to vector<2x4x1xf32>
    %166 = vector.broadcast %165 : vector<2x4x1xf32> to vector<2x4x64xf32>
    %167 = arith.mulf %112, %166 : vector<2x4x64xf32>
    %c0_112 = arith.constant 0 : index
    %c0_113 = arith.constant 0 : index
    %c0_114 = arith.constant 0 : index
    %168 = vector.load %arg20[%c0_112, %c0_113, %c0_114] : memref<2x4x64xf32, #tpu.memory_space<vmem>>, vector<2x4x64xf32>
    tpu.vector_store %arg20[%c0_112, %c0_113, %c0_114], %167 {strides = array<i32>} : memref<2x4x64xf32, #tpu.memory_space<vmem>>, vector<2x4x64xf32>,
    %169 = vector.shape_cast %164 : vector<2x4xf32> to vector<2x4x1xf32>
    %170 = vector.broadcast %169 : vector<2x4x1xf32> to vector<2x4x64xf32>
    %171 = arith.mulf %139, %170 : vector<2x4x64xf32>
    %c0_115 = arith.constant 0 : index
    %c0_116 = arith.constant 0 : index
    %c0_117 = arith.constant 0 : index
    %172 = vector.load %arg19[%c0_115, %c0_116, %c0_117] : memref<2x4x64xf32, #tpu.memory_space<vmem>>, vector<2x4x64xf32>
    tpu.vector_store %arg19[%c0_115, %c0_116, %c0_117], %171 {strides = array<i32>} : memref<2x4x64xf32, #tpu.memory_space<vmem>>, vector<2x4x64xf32>,
    return
  }
  func.func @transform_0(%arg0: i32) -> (i32, i32, i32) {
    %c0_i32 = arith.constant 0 : i32
    %c0_i32_0 = arith.constant 0 : i32
    %c0_i32_1 = arith.constant 0 : i32
    %c0_i32_2 = arith.constant 0 : i32
    return %c0_i32, %c0_i32_0, %c0_i32_1 : i32, i32, i32
  }
  func.func @transform_1(%arg0: i32) -> (i32, i32, i32) {
    %c0_i32 = arith.constant 0 : i32
    %c0_i32_0 = arith.constant 0 : i32
    %c0_i32_1 = arith.constant 0 : i32
    %c0_i32_2 = arith.constant 0 : i32
    return %c0_i32, %c0_i32_0, %c0_i32_1 : i32, i32, i32
  }
  func.func @transform_2(%arg0: i32) -> (i32, i32) {
    %c0_i32 = arith.constant 0 : i32
    %c0_i32_0 = arith.constant 0 : i32
    %c0_i32_1 = arith.constant 0 : i32
    return %c0_i32, %c0_i32_0 : i32, i32
  }
  func.func @transform_3(%arg0: i32) -> (i32, i32) {
    %c0_i32 = arith.constant 0 : i32
    %c0_i32_0 = arith.constant 0 : i32
    %c0_i32_1 = arith.constant 0 : i32
    return %c0_i32, %c0_i32_0 : i32, i32
  }
  func.func @transform_4(%arg0: i32) -> (i32, i32) {
    %c0_i32 = arith.constant 0 : i32
    %c0_i32_0 = arith.constant 0 : i32
    %c0_i32_1 = arith.constant 0 : i32
    return %c0_i32, %c0_i32_0 : i32, i32
  }
  func.func @transform_5(%arg0: i32) -> (i32, i32) {
    %c0_i32 = arith.constant 0 : i32
    %c0_i32_0 = arith.constant 0 : i32
    %c0_i32_1 = arith.constant 0 : i32
    return %c0_i32, %c0_i32_0 : i32, i32
  }
  func.func @transform_6(%arg0: i32) -> (i32, i32) {
    %c0_i32 = arith.constant 0 : i32
    %c0_i32_0 = arith.constant 0 : i32
    %c0_i32_1 = arith.constant 0 : i32
    return %c0_i32, %c0_i32_0 : i32, i32
  }
  func.func @transform_7(%arg0: i32) -> (i32, i32) {
    %c0_i32 = arith.constant 0 : i32
    %c0_i32_0 = arith.constant 0 : i32
    %c0_i32_1 = arith.constant 0 : i32
    return %c0_i32, %c0_i32_0 : i32, i32
  }
  func.func @transform_8(%arg0: i32) -> (i32, i32) {
    %c0_i32 = arith.constant 0 : i32
    %c0_i32_0 = arith.constant 0 : i32
    %c0_i32_1 = arith.constant 0 : i32
    return %c0_i32, %c0_i32_0 : i32, i32
  }
  func.func @transform_9(%arg0: i32) -> (i32, i32) {
    %c0_i32 = arith.constant 0 : i32
    %c0_i32_0 = arith.constant 0 : i32
    %c0_i32_1 = arith.constant 0 : i32
    return %c0_i32, %c0_i32_0 : i32, i32
  }
  func.func @transform_10(%arg0: i32) -> (i32, i32) {
    %c0_i32 = arith.constant 0 : i32
    %c0_i32_0 = arith.constant 0 : i32
    %c0_i32_1 = arith.constant 0 : i32
    return %c0_i32, %c0_i32_0 : i32, i32
  }
  func.func @transform_11(%arg0: i32) -> (i32, i32) {
    %c0_i32 = arith.constant 0 : i32
    %c0_i32_0 = arith.constant 0 : i32
    %c0_i32_1 = arith.constant 0 : i32
    return %c0_i32, %c0_i32_0 : i32, i32
  }
  func.func @transform_12(%arg0: i32) -> (i32, i32) {
    %c0_i32 = arith.constant 0 : i32
    %c0_i32_0 = arith.constant 0 : i32
    %c0_i32_1 = arith.constant 0 : i32
    return %c0_i32, %c0_i32_0 : i32, i32
  }
  func.func @transform_13(%arg0: i32) -> (i32, i32) {
    %c0_i32 = arith.constant 0 : i32
    %c0_i32_0 = arith.constant 0 : i32
    %c0_i32_1 = arith.constant 0 : i32
    return %c0_i32, %c0_i32_0 : i32, i32
  }
  func.func @transform_14(%arg0: i32) -> (i32, i32) {
    %c0_i32 = arith.constant 0 : i32
    %c0_i32_0 = arith.constant 0 : i32
    %c0_i32_1 = arith.constant 0 : i32
    return %c0_i32, %c0_i32_0 : i32, i32
  }
  func.func @transform_15(%arg0: i32) -> (i32, i32) {
    %c0_i32 = arith.constant 0 : i32
    %c0_i32_0 = arith.constant 0 : i32
    %c0_i32_1 = arith.constant 0 : i32
    return %c0_i32, %c0_i32_0 : i32, i32
  }
  func.func @transform_16(%arg0: i32) -> (i32, i32) {
    %c0_i32 = arith.constant 0 : i32
    %c0_i32_0 = arith.constant 0 : i32
    %c0_i32_1 = arith.constant 0 : i32
    return %c0_i32, %c0_i32_0 : i32, i32
  }
  func.func @transform_17(%arg0: i32) -> (i32, i32) {
    %c0_i32 = arith.constant 0 : i32
    %c0_i32_0 = arith.constant 0 : i32
    %c0_i32_1 = arith.constant 0 : i32
    return %c0_i32, %c0_i32_0 : i32, i32
  }
  func.func @transform_18(%arg0: i32) -> (i32, i32, i32) {
    %c0_i32 = arith.constant 0 : i32
    %c0_i32_0 = arith.constant 0 : i32
    %c0_i32_1 = arith.constant 0 : i32
    %c0_i32_2 = arith.constant 0 : i32
    return %c0_i32, %c0_i32_0, %c0_i32_1 : i32, i32, i32
  }
  func.func @transform_19(%arg0: i32) -> (i32, i32, i32) {
    %c0_i32 = arith.constant 0 : i32
    %c0_i32_0 = arith.constant 0 : i32
    %c0_i32_1 = arith.constant 0 : i32
    %c0_i32_2 = arith.constant 0 : i32
    return %c0_i32, %c0_i32_0, %c0_i32_1 : i32, i32, i32
  }
}

</mosaic_0001>

<llo_original>
// kernel: tpu_custom_call.1
$region0: #{tpu_custom_call.1}
  #allocation0 [shape = 'u32[]', space=smem, size = 0x4, offset = 0x4, fixed_abs, tag = 'smem constant byte address 0x4 - core index']
  #allocation1 [shape = 'u32[144,128]{1,0:T(1,128)}', space=vmem, size = 0x12000, scoped, tag = 'internal scratch']
  #allocation2 [shape = 'f32[2,4,64]{2,1,0:T(4,128)}', space=vmem, size = 0x1000, scoped, tag = 'scratch operand']
  #allocation3 [shape = 'f32[2,4,64]{2,1,0:T(4,128)}', space=vmem, size = 0x1000, scoped, tag = 'scratch operand']
  %s0 = inlined_call_operand.vmem [shape: f32[2,16,64], index: 0, kind: input, shape index: {}]
  %s1 = inlined_call_operand.hbm [shape: f32[2,32,64], index: 1, kind: input, shape index: {}]
  %s2 = inlined_call_operand.vmem [shape: f32[8,16], index: 2, kind: input, shape index: {}]
  %s3 = inlined_call_operand.vmem [shape: f32[8,1], index: 3, kind: input, shape index: {}]
  %s4 = inlined_call_operand.vmem [shape: f32[8,32], index: 4, kind: input, shape index: {}]
  %s5 = inlined_call_operand.vmem [shape: f32[8,1], index: 5, kind: input, shape index: {}]
  %s6 = inlined_call_operand.vmem [shape: f32[4,4], index: 6, kind: input, shape index: {}]
  %s7 = inlined_call_operand.vmem [shape: f32[4,1], index: 7, kind: input, shape index: {}]
  %s8 = inlined_call_operand.vmem [shape: f32[4,1], index: 8, kind: input, shape index: {}]
  %s9 = inlined_call_operand.vmem [shape: f32[4,1], index: 9, kind: input, shape index: {}]
  %s10 = inlined_call_operand.vmem [shape: f32[4,4], index: 10, kind: input, shape index: {}]
  %s11 = inlined_call_operand.vmem [shape: f32[4,1], index: 11, kind: input, shape index: {}]
  %s12 = inlined_call_operand.vmem [shape: f32[4,1], index: 12, kind: input, shape index: {}]
  %s13 = inlined_call_operand.vmem [shape: f32[4,1], index: 13, kind: input, shape index: {}]
  %s14 = inlined_call_operand.vmem [shape: f32[4,4], index: 14, kind: input, shape index: {}]
  %s15 = inlined_call_operand.vmem [shape: f32[1,4], index: 15, kind: input, shape index: {}]
  %s16 = inlined_call_operand.vmem [shape: f32[4,4], index: 16, kind: input, shape index: {}]
  %s17 = inlined_call_operand.vmem [shape: f32[1,4], index: 17, kind: input, shape index: {}]
  %s18 = inlined_call_operand.hbm [shape: f32[2,4,64], index: 18, kind: output, shape index: {0}]
  %s19 = inlined_call_operand.hbm [shape: f32[2,4,64], index: 19, kind: output, shape index: {1}]
  %20 = xla_tuple %s18, %s19
  %s21 = sld [smem:[#allocation0]]
  $region94: #{tpu_custom_call.1} parent=0
    _
  %s23 = ssub.s32 1, %s21
  %s24 = scalar_select 0, %s23, %s21
  $region1: #{tpu_custom_call.1} parent=0
    #allocation4 [shape = 'u8[32768]{0}', space=vmem, size = 0x8000, scoped, tag = 'input window, operand 1, single buffered']
    #allocation5 [shape = 's32[1]{0}', space=sflag, size = 0x4, scoped, tag = 'scoped memory for tpu_custom_call.1']
    #allocation6 [shape = 's32[1]{0}', space=sflag, size = 0x4, scoped, tag = 'scoped memory for tpu_custom_call.1']
    #allocation7 [shape = 'u8[4096]{0}', space=vmem, size = 0x1000, scoped, tag = 'output window, operand 0, single buffered']
    #allocation8 [shape = 'u8[4096]{0}', space=vmem, size = 0x1000, scoped, tag = 'output window, operand 1, single buffered']
    #allocation9 [shape = 's32[1]{0}', space=sflag, size = 0x4, scoped, tag = 'scoped memory for tpu_custom_call.1']
    %25 = vsyncpa [#allocation5], 0
    %26 = vsyncpa [#allocation6], 0
    %27 = vsyncpa [#allocation9], 0
    // Predicated region
    $region2: #{tpu_custom_call.1} parent=1 // pred_check
      _
    $region3: #{tpu_custom_call.1} parent=1 // pred_check_branch
      %29 = sbr.rel (0) target = $region5
    $region4: #{tpu_custom_call.1} parent=1 // pred_region
      _
    $region5: #{tpu_custom_call.1} parent=1 // pred_fallthru
      _
    // Predicated region
    $region6: #{tpu_custom_call.1} parent=1 // pred_check
      _
    $region7: #{tpu_custom_call.1} parent=1 // pred_check_branch
      %31 = sbr.rel (0) target = $region9
    $region8: #{tpu_custom_call.1} parent=1 // pred_region
      %s33 = ssub.s32 1024, 1024
      %34 = vsyncadd [#allocation5], %s33
      %s35 = sshll.u32 [#allocation4], 4
      %s36 = int_to_ptr.vmem [resolvable:$true] %s35
      %41 = dma.hbm_to_vmem [thread:$0]  %s1, 1024, %s36, [#allocation5], 128, 128, 8
    $region9: #{tpu_custom_call.1} parent=1 // pred_fallthru
      _
    // Predicated region
    $region10: #{tpu_custom_call.1} parent=1 // pred_check
      _
    $region11: #{tpu_custom_call.1} parent=1 // pred_check_branch
      %43 = sbr.rel (0) target = $region13
    $region12: #{tpu_custom_call.1} parent=1 // pred_region
      _
    $region13: #{tpu_custom_call.1} parent=1 // pred_fallthru
      _
    // Predicated region
    $region14: #{tpu_custom_call.1} parent=1 // pred_check
      _
    $region15: #{tpu_custom_call.1} parent=1 // pred_check_branch
      %45 = sbr.rel (0) target = $region17
    $region16: #{tpu_custom_call.1} parent=1 // pred_region
      _
    $region17: #{tpu_custom_call.1} parent=1 // pred_fallthru
      _
    // Predicated region
    $region18: #{tpu_custom_call.1} parent=1 // pred_check
      _
    $region19: #{tpu_custom_call.1} parent=1 // pred_check_branch
      %47 = sbr.rel (0) target = $region21
    $region20: #{tpu_custom_call.1} parent=1 // pred_region
      _
    $region21: #{tpu_custom_call.1} parent=1 // pred_fallthru
      _
    // Predicated region
    $region22: #{tpu_custom_call.1} parent=1 // pred_check
      _
    $region23: #{tpu_custom_call.1} parent=1 // pred_check_branch
      %49 = sbr.rel (0) target = $region25
    $region24: #{tpu_custom_call.1} parent=1 // pred_region
      _
    $region25: #{tpu_custom_call.1} parent=1 // pred_fallthru
      _
    // Predicated region
    $region26: #{tpu_custom_call.1} parent=1 // pred_check
      _
    $region27: #{tpu_custom_call.1} parent=1 // pred_check_branch
      %51 = sbr.rel (0) target = $region29
    $region28: #{tpu_custom_call.1} parent=1 // pred_region
      _
    $region29: #{tpu_custom_call.1} parent=1 // pred_fallthru
      _
    // Predicated region
    $region30: #{tpu_custom_call.1} parent=1 // pred_check
      _
    $region31: #{tpu_custom_call.1} parent=1 // pred_check_branch
      %53 = sbr.rel (0) target = $region33
    $region32: #{tpu_custom_call.1} parent=1 // pred_region
      _
    $region33: #{tpu_custom_call.1} parent=1 // pred_fallthru
      _
    // Predicated region
    $region34: #{tpu_custom_call.1} parent=1 // pred_check
      _
    $region35: #{tpu_custom_call.1} parent=1 // pred_check_branch
      %55 = sbr.rel (0) target = $region37
    $region36: #{tpu_custom_call.1} parent=1 // pred_region
      _
    $region37: #{tpu_custom_call.1} parent=1 // pred_fallthru
      _
    // Predicated region
    $region38: #{tpu_custom_call.1} parent=1 // pred_check
      _
    $region39: #{tpu_custom_call.1} parent=1 // pred_check_branch
      %57 = sbr.rel (0) target = $region41
    $region40: #{tpu_custom_call.1} parent=1 // pred_region
      _
    $region41: #{tpu_custom_call.1} parent=1 // pred_fallthru
      _
    // Predicated region
    $region42: #{tpu_custom_call.1} parent=1 // pred_check
      _
    $region43: #{tpu_custom_call.1} parent=1 // pred_check_branch
      %59 = sbr.rel (0) target = $region45
    $region44: #{tpu_custom_call.1} parent=1 // pred_region
      _
    $region45: #{tpu_custom_call.1} parent=1 // pred_fallthru
      _
    // Predicated region
    $region46: #{tpu_custom_call.1} parent=1 // pred_check
      _
    $region47: #{tpu_custom_call.1} parent=1 // pred_check_branch
      %61 = sbr.rel (0) target = $region49
    $region48: #{tpu_custom_call.1} parent=1 // pred_region
      _
    $region49: #{tpu_custom_call.1} parent=1 // pred_fallthru
      _
    // Predicated region
    $region50: #{tpu_custom_call.1} parent=1 // pred_check
      _
    $region51: #{tpu_custom_call.1} parent=1 // pred_check_branch
      %63 = sbr.rel (0) target = $region53
    $region52: #{tpu_custom_call.1} parent=1 // pred_region
      _
    $region53: #{tpu_custom_call.1} parent=1 // pred_fallthru
      _
    // Predicated region
    $region54: #{tpu_custom_call.1} parent=1 // pred_check
      _
    $region55: #{tpu_custom_call.1} parent=1 // pred_check_branch
      %65 = sbr.rel (0) target = $region57
    $region56: #{tpu_custom_call.1} parent=1 // pred_region
      _
    $region57: #{tpu_custom_call.1} parent=1 // pred_fallthru
      _
    // Predicated region
    $region58: #{tpu_custom_call.1} parent=1 // pred_check
      _
    $region59: #{tpu_custom_call.1} parent=1 // pred_check_branch
      %67 = sbr.rel (0) target = $region61
    $region60: #{tpu_custom_call.1} parent=1 // pred_region
      _
    $region61: #{tpu_custom_call.1} parent=1 // pred_fallthru
      _
    // Predicated region
    $region62: #{tpu_custom_call.1} parent=1 // pred_check
      _
    $region63: #{tpu_custom_call.1} parent=1 // pred_check_branch
      %69 = sbr.rel (0) target = $region65
    $region64: #{tpu_custom_call.1} parent=1 // pred_region
      _
    $region65: #{tpu_custom_call.1} parent=1 // pred_fallthru
      _
    // Predicated region
    $region66: #{tpu_custom_call.1} parent=1 // pred_check
      _
    $region67: #{tpu_custom_call.1} parent=1 // pred_check_branch
      %71 = sbr.rel (0) target = $region69
    $region68: #{tpu_custom_call.1} parent=1 // pred_region
      _
    $region69: #{tpu_custom_call.1} parent=1 // pred_fallthru
      _
    // Predicated region
    $region70: #{tpu_custom_call.1} parent=1 // pred_check
      _
    $region71: #{tpu_custom_call.1} parent=1 // pred_check_branch
      %73 = sbr.rel (0) target = $region73
    $region72: #{tpu_custom_call.1} parent=1 // pred_region
      _
    $region73: #{tpu_custom_call.1} parent=1 // pred_fallthru
      _
    // Predicated region
    $region74: #{tpu_custom_call.1} parent=1 // pred_check
      _
    $region75: #{tpu_custom_call.1} parent=1 // pred_check_branch
      %75 = sbr.rel (0) target = $region77
    $region76: #{tpu_custom_call.1} parent=1 // pred_region
      %76 = dma.done [#allocation5], 1024
    $region77: #{tpu_custom_call.1} parent=1 // pred_fallthru
      _
    %v77 = vld [vmem:[%s2] sm:$0xff]
    %v78 = vld [vmem:[%s3] sm:$0xff]
    %v79 = vld [vmem:[%s4] sm:$0xff]
    %v80 = vld [vmem:[%s5] sm:$0xff]
    %v81 = vld [vmem:[%s6] sm:$0xf]
    %v82 = vld [vmem:[%s7] sm:$0xf]
    %v83 = vld [vmem:[%s10] sm:$0xf]
    %v84 = vld [vmem:[%s11] sm:$0xf]
    %v85 = vld [vmem:[%s0] sm:$0xff]
    %v86 = vld [vmem:[%s0 + $0x8] sm:$0xff]
    %v87 = vld [vmem:[#allocation4] sm:$0xff]
    %v88 = vld [vmem:[#allocation4 + $0x8] sm:$0xff]
    %v89 = vld [vmem:[#allocation4 + $0x10] sm:$0xff]
    %v90 = vld [vmem:[#allocation4 + $0x18] sm:$0xff]
    %92 = vset.pattern.permute.xlu0 0
    %93 = vperm.xlu0 %92, %v78
    %v94 = vpop.permute.xlu0 %93
    %vm96 = vcmask 130048
    %v98 = vsel %vm96, %v77, 0
    %100 = vmatprep.subr.mxu0 0.0
    %101 = vmatpush1.msra.mxu0 %v85
    %102 = vmatprep.subr.mxu0 0.0
    %103 = vmatpush1.msra.mxu0 %v86
    %104 = vmatprep.subr.mxu0 0.0
    %105 = vmatpush1.msra.mxu0 0.0
    %106 = vmatprep.subr.mxu0 0.0
    %107 = vmatpush1.msra.mxu0 0.0
    %108 = vmatprep.subr.mxu0 0.0
    %109 = vmatpush1.msra.mxu0 0.0
    %110 = vmatprep.subr.mxu0 0.0
    %111 = vmatpush1.msra.mxu0 0.0
    %112 = vmatprep.subr.mxu0 0.0
    %113 = vmatpush1.msra.mxu0 0.0
    %114 = vmatprep.subr.mxu0 0.0
    %115 = vmatpush1.msra.mxu0 0.0
    %116 = vmatprep.subr.mxu0 0.0
    %117 = vmatpush1.msra.mxu0 0.0
    %118 = vmatprep.subr.mxu0 0.0
    %119 = vmatpush1.msra.mxu0 0.0
    %120 = vmatprep.subr.mxu0 0.0
    %121 = vmatpush1.msra.mxu0 0.0
    %122 = vmatprep.subr.mxu0 0.0
    %123 = vmatpush1.msra.mxu0 0.0
    %124 = vmatprep.subr.mxu0 0.0
    %125 = vmatpush1.msra.mxu0 0.0
    %126 = vmatprep.subr.mxu0 0.0
    %127 = vmatpush1.msra.mxu0 0.0
    %128 = vmatprep.subr.mxu0 0.0
    %129 = vmatpush1.msra.mxu0 0.0
    %130 = vmatprep.subr.mxu0 0.0
    %131 = vmatpush1.msra.mxu0 0.0
    %132 = vmatprep.subr.mxu0 0.0
    %133 = vmatpush1.msra.mxu0 0.0
    %134 = vmatprep.subr.mxu0 0.0
    %135 = vmatpush1.msra.mxu0 0.0
    %136 = vmatprep.subr.mxu0 0.0
    %137 = vmatpush1.msra.mxu0 0.0
    %138 = vmatprep.subr.mxu0 0.0
    %139 = vmatpush1.msra.mxu0 0.0
    %140 = vmatprep.subr.mxu0 0.0
    %141 = vmatpush1.msra.mxu0 0.0
    %142 = vmatprep.subr.mxu0 0.0
    %143 = vmatpush1.msra.mxu0 0.0
    %144 = vmatprep.subr.mxu0 0.0
    %145 = vmatpush1.msra.mxu0 0.0
    %146 = vmatprep.subr.mxu0 0.0
    %147 = vmatpush1.msra.mxu0 0.0
    %148 = vmatprep.subr.mxu0 0.0
    %149 = vmatpush1.msra.mxu0 0.0
    %150 = vmatprep.subr.mxu0 0.0
    %151 = vmatpush1.msra.mxu0 0.0
    %152 = vmatprep.subr.mxu0 0.0
    %153 = vmatpush1.msra.mxu0 0.0
    %154 = vmatprep.subr.mxu0 0.0
    %155 = vmatpush1.msra.mxu0 0.0
    %156 = vmatprep.subr.mxu0 0.0
    %157 = vmatpush1.msra.mxu0 0.0
    %158 = vmatprep.subr.mxu0 0.0
    %159 = vmatpush1.msra.mxu0 0.0
    %160 = vmatprep.subr.mxu0 0.0
    %161 = vmatpush1.msra.mxu0 0.0
    %162 = vmatprep.subr.mxu0 0.0
    %163 = vmatpush1.msra.mxu0 0.0
    %164 = vmatprep.mubr.f32.mxu0 0.0
    %165 = vmatmul.mubr.f32.gmra.mrb[0].mxu0 %v98
    %v166 = vpop.f32.mrb[0].mxu0
    %v167 = vadd.f32 %v94, %v166
    %v168 = vpop.f32.mrb[0].mxu0
    %169 = vdwg.mxu0
    %171 = vset.pattern.permute.xlu0 0
    %172 = vperm.xlu0 %171, %v80
    %v173 = vpop.permute.xlu0 %172
    %vm175 = vcmask 261120
    %v177 = vsel %vm175, %v79, 0
    %179 = vmatprep.subr.mxu0 0.0
    %180 = vmatpush1.msra.mxu0 %v87
    %181 = vmatprep.subr.mxu0 0.0
    %182 = vmatpush1.msra.mxu0 %v88
    %183 = vmatprep.subr.mxu0 0.0
    %184 = vmatpush1.msra.mxu0 %v89
    %185 = vmatprep.subr.mxu0 0.0
    %186 = vmatpush1.msra.mxu0 %v90
    %187 = vmatprep.subr.mxu0 0.0
    %188 = vmatpush1.msra.mxu0 0.0
    %189 = vmatprep.subr.mxu0 0.0
    %190 = vmatpush1.msra.mxu0 0.0
    %191 = vmatprep.subr.mxu0 0.0
    %192 = vmatpush1.msra.mxu0 0.0
    %193 = vmatprep.subr.mxu0 0.0
    %194 = vmatpush1.msra.mxu0 0.0
    %195 = vmatprep.subr.mxu0 0.0
    %196 = vmatpush1.msra.mxu0 0.0
    %197 = vmatprep.subr.mxu0 0.0
    %198 = vmatpush1.msra.mxu0 0.0
    %199 = vmatprep.subr.mxu0 0.0
    %200 = vmatpush1.msra.mxu0 0.0
    %201 = vmatprep.subr.mxu0 0.0
    %202 = vmatpush1.msra.mxu0 0.0
    %203 = vmatprep.subr.mxu0 0.0
    %204 = vmatpush1.msra.mxu0 0.0
    %205 = vmatprep.subr.mxu0 0.0
    %206 = vmatpush1.msra.mxu0 0.0
    %207 = vmatprep.subr.mxu0 0.0
    %208 = vmatpush1.msra.mxu0 0.0
    %209 = vmatprep.subr.mxu0 0.0
    %210 = vmatpush1.msra.mxu0 0.0
    %211 = vmatprep.subr.mxu0 0.0
    %212 = vmatpush1.msra.mxu0 0.0
    %213 = vmatprep.subr.mxu0 0.0
    %214 = vmatpush1.msra.mxu0 0.0
    %215 = vmatprep.subr.mxu0 0.0
    %216 = vmatpush1.msra.mxu0 0.0
    %217 = vmatprep.subr.mxu0 0.0
    %218 = vmatpush1.msra.mxu0 0.0
    %219 = vmatprep.subr.mxu0 0.0
    %220 = vmatpush1.msra.mxu0 0.0
    %221 = vmatprep.subr.mxu0 0.0
    %222 = vmatpush1.msra.mxu0 0.0
    %223 = vmatprep.subr.mxu0 0.0
    %224 = vmatpush1.msra.mxu0 0.0
    %225 = vmatprep.subr.mxu0 0.0
    %226 = vmatpush1.msra.mxu0 0.0
    %227 = vmatprep.subr.mxu0 0.0
    %228 = vmatpush1.msra.mxu0 0.0
    %229 = vmatprep.subr.mxu0 0.0
    %230 = vmatpush1.msra.mxu0 0.0
    %231 = vmatprep.subr.mxu0 0.0
    %232 = vmatpush1.msra.mxu0 0.0
    %233 = vmatprep.subr.mxu0 0.0
    %234 = vmatpush1.msra.mxu0 0.0
    %235 = vmatprep.subr.mxu0 0.0
    %236 = vmatpush1.msra.mxu0 0.0
    %237 = vmatprep.subr.mxu0 0.0
    %238 = vmatpush1.msra.mxu0 0.0
    %239 = vmatprep.subr.mxu0 0.0
    %240 = vmatpush1.msra.mxu0 0.0
    %241 = vmatprep.subr.mxu0 0.0
    %242 = vmatpush1.msra.mxu0 0.0
    %243 = vmatprep.mubr.f32.mxu0 0.0
    %244 = vmatmul.mubr.f32.gmra.mrb[0].mxu0 %v177
    %v245 = vpop.f32.mrb[0].mxu0
    %v246 = vadd.f32 %v173, %v245
    %v247 = vpop.f32.mrb[0].mxu0
    %248 = vdwg.mxu0
    %249 = vxpose.xlu0.b32.start [1/16] %v246, 128
    %250 = vxpose.xlu0.b32.cont [2/16] 0.0, 128
    %251 = vxpose.xlu0.b32.cont [3/16] 0.0, 128
    %252 = vxpose.xlu0.b32.cont [4/16] 0.0, 128
    %253 = vxpose.xlu0.b32.cont [5/16] 0.0, 128
    %254 = vxpose.xlu0.b32.cont [6/16] 0.0, 128
    %255 = vxpose.xlu0.b32.cont [7/16] 0.0, 128
    %256 = vxpose.xlu0.b32.cont [8/16] 0.0, 128
    %257 = vxpose.xlu0.b32.cont [9/16] 0.0, 128
    %258 = vxpose.xlu0.b32.cont [10/16] 0.0, 128
    %259 = vxpose.xlu0.b32.cont [11/16] 0.0, 128
    %260 = vxpose.xlu0.b32.cont [12/16] 0.0, 128
    %261 = vxpose.xlu0.b32.cont [13/16] 0.0, 128
    %262 = vxpose.xlu0.b32.cont [14/16] 0.0, 128
    %263 = vxpose.xlu0.b32.cont [15/16] 0.0, 128
    %264 = vxpose.xlu0.b32.end [16/16] 0.0, 128
    %v265 = vpop.trf.xlu0
    %v266 = vpop.trf.xlu0
    %v267 = vpop.trf.xlu0
    %v268 = vpop.trf.xlu0
    %v269 = vpop.trf.xlu0
    %v270 = vpop.trf.xlu0
    %v271 = vpop.trf.xlu0
    %v272 = vpop.trf.xlu0
    %v273 = vpop.trf.xlu0
    %v274 = vpop.trf.xlu0
    %v275 = vpop.trf.xlu0
    %v276 = vpop.trf.xlu0
    %v277 = vpop.trf.xlu0
    %v278 = vpop.trf.xlu0
    %v279 = vpop.trf.xlu0
    %v280 = vpop.trf.xlu0
    %vm281 = vcmask 31744
    %v283 = vsel %vm281, %v265, 0
    %v286 = vsel %vm281, %v266, 0
    %v289 = vsel %vm281, %v267, 0
    %v292 = vsel %vm281, %v268, 0
    %v295 = vsel %vm281, %v269, 0
    %v298 = vsel %vm281, %v270, 0
    %v301 = vsel %vm281, %v271, 0
    %v304 = vsel %vm281, %v272, 0
    %vm306 = vcmask 1043456
    %v308 = vsel %vm306, %v167, 0
    %310 = vmatprep.subr.mxu0 0.0
    %311 = vmatpush1.msra.mxu0 %v308
    %312 = vmatprep.subr.mxu0 0.0
    %313 = vmatpush1.msra.mxu0 0.0
    %314 = vmatprep.subr.mxu0 0.0
    %315 = vmatpush1.msra.mxu0 0.0
    %316 = vmatprep.subr.mxu0 0.0
    %317 = vmatpush1.msra.mxu0 0.0
    %318 = vmatprep.subr.mxu0 0.0
    %319 = vmatpush1.msra.mxu0 0.0
    %320 = vmatprep.subr.mxu0 0.0
    %321 = vmatpush1.msra.mxu0 0.0
    %322 = vmatprep.subr.mxu0 0.0
    %323 = vmatpush1.msra.mxu0 0.0
    %324 = vmatprep.subr.mxu0 0.0
    %325 = vmatpush1.msra.mxu0 0.0
    %326 = vmatprep.subr.mxu0 0.0
    %327 = vmatpush1.msra.mxu0 0.0
    %328 = vmatprep.subr.mxu0 0.0
    %329 = vmatpush1.msra.mxu0 0.0
    %330 = vmatprep.subr.mxu0 0.0
    %331 = vmatpush1.msra.mxu0 0.0
    %332 = vmatprep.subr.mxu0 0.0
    %333 = vmatpush1.msra.mxu0 0.0
    %334 = vmatprep.subr.mxu0 0.0
    %335 = vmatpush1.msra.mxu0 0.0
    %336 = vmatprep.subr.mxu0 0.0
    %337 = vmatpush1.msra.mxu0 0.0
    %338 = vmatprep.subr.mxu0 0.0
    %339 = vmatpush1.msra.mxu0 0.0
    %340 = vmatprep.subr.mxu0 0.0
    %341 = vmatpush1.msra.mxu0 0.0
    %342 = vmatprep.subr.mxu0 0.0
    %343 = vmatpush1.msra.mxu0 0.0
    %344 = vmatprep.subr.mxu0 0.0
    %345 = vmatpush1.msra.mxu0 0.0
    %346 = vmatprep.subr.mxu0 0.0
    %347 = vmatpush1.msra.mxu0 0.0
    %348 = vmatprep.subr.mxu0 0.0
    %349 = vmatpush1.msra.mxu0 0.0
    %350 = vmatprep.subr.mxu0 0.0
    %351 = vmatpush1.msra.mxu0 0.0
    %352 = vmatprep.subr.mxu0 0.0
    %353 = vmatpush1.msra.mxu0 0.0
    %354 = vmatprep.subr.mxu0 0.0
    %355 = vmatpush1.msra.mxu0 0.0
    %356 = vmatprep.subr.mxu0 0.0
    %357 = vmatpush1.msra.mxu0 0.0
    %358 = vmatprep.subr.mxu0 0.0
    %359 = vmatpush1.msra.mxu0 0.0
    %360 = vmatprep.subr.mxu0 0.0
    %361 = vmatpush1.msra.mxu0 0.0
    %362 = vmatprep.subr.mxu0 0.0
    %363 = vmatpush1.msra.mxu0 0.0
    %364 = vmatprep.subr.mxu0 0.0
    %365 = vmatpush1.msra.mxu0 0.0
    %366 = vmatprep.subr.mxu0 0.0
    %367 = vmatpush1.msra.mxu0 0.0
    %368 = vmatprep.subr.mxu0 0.0
    %369 = vmatpush1.msra.mxu0 0.0
    %370 = vmatprep.subr.mxu0 0.0
    %371 = vmatpush1.msra.mxu0 0.0
    %372 = vmatprep.subr.mxu0 0.0
    %373 = vmatpush1.msra.mxu0 0.0
    %374 = vmatprep.mubr.f32.mxu0 0.0
    %375 = vmatmul.mubr.f32.gmra.mrb[0].mxu0 %v283
    %v376 = vpop.f32.mrb[0].mxu0
    %v377 = vadd.f32 0.0, %v376
    %v378 = vpop.f32.mrb[0].mxu0
    %379 = vmatprep.mubr.f32.mxu0 0.0
    %380 = vmatmul.mubr.f32.gmra.mrb[0].mxu0 %v286
    %v381 = vpop.f32.mrb[0].mxu0
    %v382 = vadd.f32 0.0, %v381
    %v383 = vpop.f32.mrb[0].mxu0
    %384 = vmatprep.mubr.f32.mxu0 0.0
    %385 = vmatmul.mubr.f32.gmra.mrb[0].mxu0 %v289
    %v386 = vpop.f32.mrb[0].mxu0
    %v387 = vadd.f32 0.0, %v386
    %v388 = vpop.f32.mrb[0].mxu0
    %389 = vmatprep.mubr.f32.mxu0 0.0
    %390 = vmatmul.mubr.f32.gmra.mrb[0].mxu0 %v292
    %v391 = vpop.f32.mrb[0].mxu0
    %v392 = vadd.f32 0.0, %v391
    %v393 = vpop.f32.mrb[0].mxu0
    %394 = vmatprep.mubr.f32.mxu0 0.0
    %395 = vmatmul.mubr.f32.gmra.mrb[0].mxu0 %v295
    %v396 = vpop.f32.mrb[0].mxu0
    %v397 = vadd.f32 0.0, %v396
    %v398 = vpop.f32.mrb[0].mxu0
    %399 = vmatprep.mubr.f32.mxu0 0.0
    %400 = vmatmul.mubr.f32.gmra.mrb[0].mxu0 %v298
    %v401 = vpop.f32.mrb[0].mxu0
    %v402 = vadd.f32 0.0, %v401
    %v403 = vpop.f32.mrb[0].mxu0
    %404 = vmatprep.mubr.f32.mxu0 0.0
    %405 = vmatmul.mubr.f32.gmra.mrb[0].mxu0 %v301
    %v406 = vpop.f32.mrb[0].mxu0
    %v407 = vadd.f32 0.0, %v406
    %v408 = vpop.f32.mrb[0].mxu0
    %409 = vmatprep.mubr.f32.mxu0 0.0
    %410 = vmatmul.mubr.f32.gmra.mrb[0].mxu0 %v304
    %v411 = vpop.f32.mrb[0].mxu0
    %v412 = vadd.f32 0.0, %v411
    %v413 = vpop.f32.mrb[0].mxu0
    %414 = vdwg.mxu0
    %v415 = vrot.slane %v167, 4
    %vm416 = vcmask 523264
    %v417 = vsel %vm416, %v415, 0
    %v420 = vsel %vm416, %v377, 0
    %v423 = vsel %vm416, %v382, 0
    %v426 = vsel %vm416, %v387, 0
    %v429 = vsel %vm416, %v392, 0
    %v432 = vsel %vm416, %v397, 0
    %v435 = vsel %vm416, %v402, 0
    %v438 = vsel %vm416, %v407, 0
    %v441 = vsel %vm416, %v412, 0
    %443 = vmatprep.subr.mxu0 0.0
    %444 = vmatpush1.xpose.msra.mxu0 %v420
    %445 = vmatprep.subr.mxu0 0.0
    %446 = vmatpush1.xpose.msra.mxu0 %v423
    %447 = vmatprep.subr.mxu0 0.0
    %448 = vmatpush1.xpose.msra.mxu0 %v426
    %449 = vmatprep.subr.mxu0 0.0
    %450 = vmatpush1.xpose.msra.mxu0 %v429
    %451 = vmatprep.subr.mxu0 0.0
    %452 = vmatpush1.xpose.msra.mxu0 %v432
    %453 = vmatprep.subr.mxu0 0.0
    %454 = vmatpush1.xpose.msra.mxu0 %v435
    %455 = vmatprep.subr.mxu0 0.0
    %456 = vmatpush1.xpose.msra.mxu0 %v438
    %457 = vmatprep.subr.mxu0 0.0
    %458 = vmatpush1.xpose.msra.mxu0 %v441
    %459 = vmatprep.subr.mxu0 0.0
    %460 = vmatpush1.xpose.msra.mxu0 0.0
    %461 = vmatprep.subr.mxu0 0.0
    %462 = vmatpush1.xpose.msra.mxu0 0.0
    %463 = vmatprep.subr.mxu0 0.0
    %464 = vmatpush1.xpose.msra.mxu0 0.0
    %465 = vmatprep.subr.mxu0 0.0
    %466 = vmatpush1.xpose.msra.mxu0 0.0
    %467 = vmatprep.subr.mxu0 0.0
    %468 = vmatpush1.xpose.msra.mxu0 0.0
    %469 = vmatprep.subr.mxu0 0.0
    %470 = vmatpush1.xpose.msra.mxu0 0.0
    %471 = vmatprep.subr.mxu0 0.0
    %472 = vmatpush1.xpose.msra.mxu0 0.0
    %473 = vmatprep.subr.mxu0 0.0
    %474 = vmatpush1.xpose.msra.mxu0 0.0
    %475 = vmatprep.subr.mxu0 0.0
    %476 = vmatpush1.xpose.msra.mxu0 0.0
    %477 = vmatprep.subr.mxu0 0.0
    %478 = vmatpush1.xpose.msra.mxu0 0.0
    %479 = vmatprep.subr.mxu0 0.0
    %480 = vmatpush1.xpose.msra.mxu0 0.0
    %481 = vmatprep.subr.mxu0 0.0
    %482 = vmatpush1.xpose.msra.mxu0 0.0
    %483 = vmatprep.subr.mxu0 0.0
    %484 = vmatpush1.xpose.msra.mxu0 0.0
    %485 = vmatprep.subr.mxu0 0.0
    %486 = vmatpush1.xpose.msra.mxu0 0.0
    %487 = vmatprep.subr.mxu0 0.0
    %488 = vmatpush1.xpose.msra.mxu0 0.0
    %489 = vmatprep.subr.mxu0 0.0
    %490 = vmatpush1.xpose.msra.mxu0 0.0
    %491 = vmatprep.subr.mxu0 0.0
    %492 = vmatpush1.xpose.msra.mxu0 0.0
    %493 = vmatprep.subr.mxu0 0.0
    %494 = vmatpush1.xpose.msra.mxu0 0.0
    %495 = vmatprep.subr.mxu0 0.0
    %496 = vmatpush1.xpose.msra.mxu0 0.0
    %497 = vmatprep.subr.mxu0 0.0
    %498 = vmatpush1.xpose.msra.mxu0 0.0
    %499 = vmatprep.subr.mxu0 0.0
    %500 = vmatpush1.xpose.msra.mxu0 0.0
    %501 = vmatprep.subr.mxu0 0.0
    %502 = vmatpush1.xpose.msra.mxu0 0.0
    %503 = vmatprep.subr.mxu0 0.0
    %504 = vmatpush1.xpose.msra.mxu0 0.0
    %505 = vmatprep.subr.mxu0 0.0
    %506 = vmatpush1.xpose.msra.mxu0 0.0
    %507 = vmatprep.mubr.f32.mxu0 0.0
    %508 = vmatmul.mubr.f32.gmra.mrb[0].mxu0 %v417
    %v509 = vpop.f32.mrb[0].mxu0
    %v510 = vadd.f32 0.0, %v509
    %v511 = vpop.f32.mrb[0].mxu0
    %512 = vdwg.mxu0
    %v513 = vmul.f32 %v510, 0.015625
    %v515 = vrot.slane %v246, 4
    %v516 = vsel %vm416, %v515, 0
    %518 = vmatprep.subr.mxu0 0.0
    %519 = vmatpush1.msra.mxu0 %v377
    %520 = vmatprep.subr.mxu0 0.0
    %521 = vmatpush1.msra.mxu0 %v382
    %522 = vmatprep.subr.mxu0 0.0
    %523 = vmatpush1.msra.mxu0 %v387
    %524 = vmatprep.subr.mxu0 0.0
    %525 = vmatpush1.msra.mxu0 %v392
    %526 = vmatprep.subr.mxu0 0.0
    %527 = vmatpush1.msra.mxu0 %v397
    %528 = vmatprep.subr.mxu0 0.0
    %529 = vmatpush1.msra.mxu0 %v402
    %530 = vmatprep.subr.mxu0 0.0
    %531 = vmatpush1.msra.mxu0 %v407
    %532 = vmatprep.subr.mxu0 0.0
    %533 = vmatpush1.msra.mxu0 %v412
    %534 = vmatprep.subr.mxu0 0.0
    %535 = vmatpush1.msra.mxu0 0.0
    %536 = vmatprep.subr.mxu0 0.0
    %537 = vmatpush1.msra.mxu0 0.0
    %538 = vmatprep.subr.mxu0 0.0
    %539 = vmatpush1.msra.mxu0 0.0
    %540 = vmatprep.subr.mxu0 0.0
    %541 = vmatpush1.msra.mxu0 0.0
    %542 = vmatprep.subr.mxu0 0.0
    %543 = vmatpush1.msra.mxu0 0.0
    %544 = vmatprep.subr.mxu0 0.0
    %545 = vmatpush1.msra.mxu0 0.0
    %546 = vmatprep.subr.mxu0 0.0
    %547 = vmatpush1.msra.mxu0 0.0
    %548 = vmatprep.subr.mxu0 0.0
    %549 = vmatpush1.msra.mxu0 0.0
    %550 = vmatprep.subr.mxu0 0.0
    %551 = vmatpush1.msra.mxu0 0.0
    %552 = vmatprep.subr.mxu0 0.0
    %553 = vmatpush1.msra.mxu0 0.0
    %554 = vmatprep.subr.mxu0 0.0
    %555 = vmatpush1.msra.mxu0 0.0
    %556 = vmatprep.subr.mxu0 0.0
    %557 = vmatpush1.msra.mxu0 0.0
    %558 = vmatprep.subr.mxu0 0.0
    %559 = vmatpush1.msra.mxu0 0.0
    %560 = vmatprep.subr.mxu0 0.0
    %561 = vmatpush1.msra.mxu0 0.0
    %562 = vmatprep.subr.mxu0 0.0
    %563 = vmatpush1.msra.mxu0 0.0
    %564 = vmatprep.subr.mxu0 0.0
    %565 = vmatpush1.msra.mxu0 0.0
    %566 = vmatprep.subr.mxu0 0.0
    %567 = vmatpush1.msra.mxu0 0.0
    %568 = vmatprep.subr.mxu0 0.0
    %569 = vmatpush1.msra.mxu0 0.0
    %570 = vmatprep.subr.mxu0 0.0
    %571 = vmatpush1.msra.mxu0 0.0
    %572 = vmatprep.subr.mxu0 0.0
    %573 = vmatpush1.msra.mxu0 0.0
    %574 = vmatprep.subr.mxu0 0.0
    %575 = vmatpush1.msra.mxu0 0.0
    %576 = vmatprep.subr.mxu0 0.0
    %577 = vmatpush1.msra.mxu0 0.0
    %578 = vmatprep.subr.mxu0 0.0
    %579 = vmatpush1.msra.mxu0 0.0
    %580 = vmatprep.subr.mxu0 0.0
    %581 = vmatpush1.msra.mxu0 0.0
    %582 = vmatprep.mubr.f32.mxu0 0.0
    %583 = vmatmul.mubr.f32.gmra.mrb[0].mxu0 %v516
    %v584 = vpop.f32.mrb[0].mxu0
    %v585 = vadd.f32 0.0, %v584
    %v586 = vpop.f32.mrb[0].mxu0
    %587 = vdwg.mxu0
    %v588 = vmul.f32 %v585, 0.015625
    %590 = vset.pattern.permute.xlu0 0
    %591 = vperm.xlu0 %590, %v82
    %v592 = vpop.permute.xlu0 %591
    %v595 = vsel %vm281, %v81, 0
    %v598 = vsel %vm306, %v513, 0
    %600 = vmatprep.subr.mxu0 0.0
    %601 = vmatpush1.msra.mxu0 %v598
    %602 = vmatprep.subr.mxu0 0.0
    %603 = vmatpush1.msra.mxu0 0.0
    %604 = vmatprep.subr.mxu0 0.0
    %605 = vmatpush1.msra.mxu0 0.0
    %606 = vmatprep.subr.mxu0 0.0
    %607 = vmatpush1.msra.mxu0 0.0
    %608 = vmatprep.subr.mxu0 0.0
    %609 = vmatpush1.msra.mxu0 0.0
    %610 = vmatprep.subr.mxu0 0.0
    %611 = vmatpush1.msra.mxu0 0.0
    %612 = vmatprep.subr.mxu0 0.0
    %613 = vmatpush1.msra.mxu0 0.0
    %614 = vmatprep.subr.mxu0 0.0
    %615 = vmatpush1.msra.mxu0 0.0
    %616 = vmatprep.subr.mxu0 0.0
    %617 = vmatpush1.msra.mxu0 0.0
    %618 = vmatprep.subr.mxu0 0.0
    %619 = vmatpush1.msra.mxu0 0.0
    %620 = vmatprep.subr.mxu0 0.0
    %621 = vmatpush1.msra.mxu0 0.0
    %622 = vmatprep.subr.mxu0 0.0
    %623 = vmatpush1.msra.mxu0 0.0
    %624 = vmatprep.subr.mxu0 0.0
    %625 = vmatpush1.msra.mxu0 0.0
    %626 = vmatprep.subr.mxu0 0.0
    %627 = vmatpush1.msra.mxu0 0.0
    %628 = vmatprep.subr.mxu0 0.0
    %629 = vmatpush1.msra.mxu0 0.0
    %630 = vmatprep.subr.mxu0 0.0
    %631 = vmatpush1.msra.mxu0 0.0
    %632 = vmatprep.subr.mxu0 0.0
    %633 = vmatpush1.msra.mxu0 0.0
    %634 = vmatprep.subr.mxu0 0.0
    %635 = vmatpush1.msra.mxu0 0.0
    %636 = vmatprep.subr.mxu0 0.0
    %637 = vmatpush1.msra.mxu0 0.0
    %638 = vmatprep.subr.mxu0 0.0
    %639 = vmatpush1.msra.mxu0 0.0
    %640 = vmatprep.subr.mxu0 0.0
    %641 = vmatpush1.msra.mxu0 0.0
    %642 = vmatprep.subr.mxu0 0.0
    %643 = vmatpush1.msra.mxu0 0.0
    %644 = vmatprep.subr.mxu0 0.0
    %645 = vmatpush1.msra.mxu0 0.0
    %646 = vmatprep.subr.mxu0 0.0
    %647 = vmatpush1.msra.mxu0 0.0
    %648 = vmatprep.subr.mxu0 0.0
    %649 = vmatpush1.msra.mxu0 0.0
    %650 = vmatprep.subr.mxu0 0.0
    %651 = vmatpush1.msra.mxu0 0.0
    %652 = vmatprep.subr.mxu0 0.0
    %653 = vmatpush1.msra.mxu0 0.0
    %654 = vmatprep.subr.mxu0 0.0
    %655 = vmatpush1.msra.mxu0 0.0
    %656 = vmatprep.subr.mxu0 0.0
    %657 = vmatpush1.msra.mxu0 0.0
    %658 = vmatprep.subr.mxu0 0.0
    %659 = vmatpush1.msra.mxu0 0.0
    %660 = vmatprep.subr.mxu0 0.0
    %661 = vmatpush1.msra.mxu0 0.0
    %662 = vmatprep.subr.mxu0 0.0
    %663 = vmatpush1.msra.mxu0 0.0
    %664 = vmatprep.mubr.f32.mxu0 0.0
    %665 = vmatmul.mubr.f32.gmra.mrb[0].mxu0 %v595
    %v666 = vpop.f32.mrb[0].mxu0
    %v667 = vadd.f32 %v592, %v666
    %v668 = vpop.f32.mrb[0].mxu0
    %669 = vdwg.mxu0
    %vm670 = vcmask 519168
    %671 = vst.msk [vmem:[#allocation8] sm:$0xf] %vm670, %v667
    %673 = vset.pattern.permute.xlu0 0
    %674 = vperm.xlu0 %673, %v84
    %v675 = vpop.permute.xlu0 %674
    %v678 = vsel %vm281, %v83, 0
    %v681 = vsel %vm306, %v588, 0
    %683 = vmatprep.subr.mxu0 0.0
    %684 = vmatpush1.msra.mxu0 %v681
    %685 = vmatprep.subr.mxu0 0.0
    %686 = vmatpush1.msra.mxu0 0.0
    %687 = vmatprep.subr.mxu0 0.0
    %688 = vmatpush1.msra.mxu0 0.0
    %689 = vmatprep.subr.mxu0 0.0
    %690 = vmatpush1.msra.mxu0 0.0
    %691 = vmatprep.subr.mxu0 0.0
    %692 = vmatpush1.msra.mxu0 0.0
    %693 = vmatprep.subr.mxu0 0.0
    %694 = vmatpush1.msra.mxu0 0.0
    %695 = vmatprep.subr.mxu0 0.0
    %696 = vmatpush1.msra.mxu0 0.0
    %697 = vmatprep.subr.mxu0 0.0
    %698 = vmatpush1.msra.mxu0 0.0
    %699 = vmatprep.subr.mxu0 0.0
    %700 = vmatpush1.msra.mxu0 0.0
    %701 = vmatprep.subr.mxu0 0.0
    %702 = vmatpush1.msra.mxu0 0.0
    %703 = vmatprep.subr.mxu0 0.0
    %704 = vmatpush1.msra.mxu0 0.0
    %705 = vmatprep.subr.mxu0 0.0
    %706 = vmatpush1.msra.mxu0 0.0
    %707 = vmatprep.subr.mxu0 0.0
    %708 = vmatpush1.msra.mxu0 0.0
    %709 = vmatprep.subr.mxu0 0.0
    %710 = vmatpush1.msra.mxu0 0.0
    %711 = vmatprep.subr.mxu0 0.0
    %712 = vmatpush1.msra.mxu0 0.0
    %713 = vmatprep.subr.mxu0 0.0
    %714 = vmatpush1.msra.mxu0 0.0
    %715 = vmatprep.subr.mxu0 0.0
    %716 = vmatpush1.msra.mxu0 0.0
    %717 = vmatprep.subr.mxu0 0.0
    %718 = vmatpush1.msra.mxu0 0.0
    %719 = vmatprep.subr.mxu0 0.0
    %720 = vmatpush1.msra.mxu0 0.0
    %721 = vmatprep.subr.mxu0 0.0
    %722 = vmatpush1.msra.mxu0 0.0
    %723 = vmatprep.subr.mxu0 0.0
    %724 = vmatpush1.msra.mxu0 0.0
    %725 = vmatprep.subr.mxu0 0.0
    %726 = vmatpush1.msra.mxu0 0.0
    %727 = vmatprep.subr.mxu0 0.0
    %728 = vmatpush1.msra.mxu0 0.0
    %729 = vmatprep.subr.mxu0 0.0
    %730 = vmatpush1.msra.mxu0 0.0
    %731 = vmatprep.subr.mxu0 0.0
    %732 = vmatpush1.msra.mxu0 0.0
    %733 = vmatprep.subr.mxu0 0.0
    %734 = vmatpush1.msra.mxu0 0.0
    %735 = vmatprep.subr.mxu0 0.0
    %736 = vmatpush1.msra.mxu0 0.0
    %737 = vmatprep.subr.mxu0 0.0
    %738 = vmatpush1.msra.mxu0 0.0
    %739 = vmatprep.subr.mxu0 0.0
    %740 = vmatpush1.msra.mxu0 0.0
    %741 = vmatprep.subr.mxu0 0.0
    %742 = vmatpush1.msra.mxu0 0.0
    %743 = vmatprep.subr.mxu0 0.0
    %744 = vmatpush1.msra.mxu0 0.0
    %745 = vmatprep.subr.mxu0 0.0
    %746 = vmatpush1.msra.mxu0 0.0
    %747 = vmatprep.mubr.f32.mxu0 0.0
    %748 = vmatmul.mubr.f32.gmra.mrb[0].mxu0 %v678
    %v749 = vpop.f32.mrb[0].mxu0
    %v750 = vadd.f32 %v675, %v749
    %v751 = vpop.f32.mrb[0].mxu0
    %752 = vdwg.mxu0
    %753 = vst.msk [vmem:[#allocation7] sm:$0xf] %vm670, %v750
    %vm754 = vcmask 523268
    %755 = vst.msk [vmem:[#allocation2 - $0x4] sm:$0xf0] %vm754, %v246
    %756 = vst.msk [vmem:[#allocation3 - $0x4] sm:$0xf0] %vm754, %v167
    %s757 = scalar_lea.vmem %s0, 16
    %v758 = vld [vmem:[%s757] sm:$0xff]
    %v759 = vld [vmem:[%s757 + $0x8] sm:$0xff]
    %s760 = scalar_lea.vmem [#allocation4], 32
    %v761 = vld [vmem:[%s760] sm:$0xff]
    %v762 = vld [vmem:[%s760 + $0x8] sm:$0xff]
    %v763 = vld [vmem:[%s760 + $0x10] sm:$0xff]
    %v764 = vld [vmem:[%s760 + $0x18] sm:$0xff]
    %765 = vmatprep.subr.mxu0 0.0
    %766 = vmatpush1.msra.mxu0 %v758
    %767 = vmatprep.subr.mxu0 0.0
    %768 = vmatpush1.msra.mxu0 %v759
    %769 = vmatprep.subr.mxu0 0.0
    %770 = vmatpush1.msra.mxu0 0.0
    %771 = vmatprep.subr.mxu0 0.0
    %772 = vmatpush1.msra.mxu0 0.0
    %773 = vmatprep.subr.mxu0 0.0
    %774 = vmatpush1.msra.mxu0 0.0
    %775 = vmatprep.subr.mxu0 0.0
    %776 = vmatpush1.msra.mxu0 0.0
    %777 = vmatprep.subr.mxu0 0.0
    %778 = vmatpush1.msra.mxu0 0.0
    %779 = vmatprep.subr.mxu0 0.0
    %780 = vmatpush1.msra.mxu0 0.0
    %781 = vmatprep.subr.mxu0 0.0
    %782 = vmatpush1.msra.mxu0 0.0
    %783 = vmatprep.subr.mxu0 0.0
    %784 = vmatpush1.msra.mxu0 0.0
    %785 = vmatprep.subr.mxu0 0.0
    %786 = vmatpush1.msra.mxu0 0.0
    %787 = vmatprep.subr.mxu0 0.0
    %788 = vmatpush1.msra.mxu0 0.0
    %789 = vmatprep.subr.mxu0 0.0
    %790 = vmatpush1.msra.mxu0 0.0
    %791 = vmatprep.subr.mxu0 0.0
    %792 = vmatpush1.msra.mxu0 0.0
    %793 = vmatprep.subr.mxu0 0.0
    %794 = vmatpush1.msra.mxu0 0.0
    %795 = vmatprep.subr.mxu0 0.0
    %796 = vmatpush1.msra.mxu0 0.0
    %797 = vmatprep.subr.mxu0 0.0
    %798 = vmatpush1.msra.mxu0 0.0
    %799 = vmatprep.subr.mxu0 0.0
    %800 = vmatpush1.msra.mxu0 0.0
    %801 = vmatprep.subr.mxu0 0.0
    %802 = vmatpush1.msra.mxu0 0.0
    %803 = vmatprep.subr.mxu0 0.0
    %804 = vmatpush1.msra.mxu0 0.0
    %805 = vmatprep.subr.mxu0 0.0
    %806 = vmatpush1.msra.mxu0 0.0
    %807 = vmatprep.subr.mxu0 0.0
    %808 = vmatpush1.msra.mxu0 0.0
    %809 = vmatprep.subr.mxu0 0.0
    %810 = vmatpush1.msra.mxu0 0.0
    %811 = vmatprep.subr.mxu0 0.0
    %812 = vmatpush1.msra.mxu0 0.0
    %813 = vmatprep.subr.mxu0 0.0
    %814 = vmatpush1.msra.mxu0 0.0
    %815 = vmatprep.subr.mxu0 0.0
    %816 = vmatpush1.msra.mxu0 0.0
    %817 = vmatprep.subr.mxu0 0.0
    %818 = vmatpush1.msra.mxu0 0.0
    %819 = vmatprep.subr.mxu0 0.0
    %820 = vmatpush1.msra.mxu0 0.0
    %821 = vmatprep.subr.mxu0 0.0
    %822 = vmatpush1.msra.mxu0 0.0
    %823 = vmatprep.subr.mxu0 0.0
    %824 = vmatpush1.msra.mxu0 0.0
    %825 = vmatprep.subr.mxu0 0.0
    %826 = vmatpush1.msra.mxu0 0.0
    %827 = vmatprep.subr.mxu0 0.0
    %828 = vmatpush1.msra.mxu0 0.0
    %829 = vmatprep.mubr.f32.mxu0 0.0
    %830 = vmatmul.mubr.f32.gmra.mrb[0].mxu0 %v98
    %v831 = vpop.f32.mrb[0].mxu0
    %v832 = vadd.f32 %v94, %v831
    %v833 = vpop.f32.mrb[0].mxu0
    %834 = vdwg.mxu0
    %835 = vmatprep.subr.mxu0 0.0
    %836 = vmatpush1.msra.mxu0 %v761
    %837 = vmatprep.subr.mxu0 0.0
    %838 = vmatpush1.msra.mxu0 %v762
    %839 = vmatprep.subr.mxu0 0.0
    %840 = vmatpush1.msra.mxu0 %v763
    %841 = vmatprep.subr.mxu0 0.0
    %842 = vmatpush1.msra.mxu0 %v764
    %843 = vmatprep.subr.mxu0 0.0
    %844 = vmatpush1.msra.mxu0 0.0
    %845 = vmatprep.subr.mxu0 0.0
    %846 = vmatpush1.msra.mxu0 0.0
    %847 = vmatprep.subr.mxu0 0.0
    %848 = vmatpush1.msra.mxu0 0.0
    %849 = vmatprep.subr.mxu0 0.0
    %850 = vmatpush1.msra.mxu0 0.0
    %851 = vmatprep.subr.mxu0 0.0
    %852 = vmatpush1.msra.mxu0 0.0
    %853 = vmatprep.subr.mxu0 0.0
    %854 = vmatpush1.msra.mxu0 0.0
    %855 = vmatprep.subr.mxu0 0.0
    %856 = vmatpush1.msra.mxu0 0.0
    %857 = vmatprep.subr.mxu0 0.0
    %858 = vmatpush1.msra.mxu0 0.0
    %859 = vmatprep.subr.mxu0 0.0
    %860 = vmatpush1.msra.mxu0 0.0
    %861 = vmatprep.subr.mxu0 0.0
    %862 = vmatpush1.msra.mxu0 0.0
    %863 = vmatprep.subr.mxu0 0.0
    %864 = vmatpush1.msra.mxu0 0.0
    %865 = vmatprep.subr.mxu0 0.0
    %866 = vmatpush1.msra.mxu0 0.0
    %867 = vmatprep.subr.mxu0 0.0
    %868 = vmatpush1.msra.mxu0 0.0
    %869 = vmatprep.subr.mxu0 0.0
    %870 = vmatpush1.msra.mxu0 0.0
    %871 = vmatprep.subr.mxu0 0.0
    %872 = vmatpush1.msra.mxu0 0.0
    %873 = vmatprep.subr.mxu0 0.0
    %874 = vmatpush1.msra.mxu0 0.0
    %875 = vmatprep.subr.mxu0 0.0
    %876 = vmatpush1.msra.mxu0 0.0
    %877 = vmatprep.subr.mxu0 0.0
    %878 = vmatpush1.msra.mxu0 0.0
    %879 = vmatprep.subr.mxu0 0.0
    %880 = vmatpush1.msra.mxu0 0.0
    %881 = vmatprep.subr.mxu0 0.0
    %882 = vmatpush1.msra.mxu0 0.0
    %883 = vmatprep.subr.mxu0 0.0
    %884 = vmatpush1.msra.mxu0 0.0
    %885 = vmatprep.subr.mxu0 0.0
    %886 = vmatpush1.msra.mxu0 0.0
    %887 = vmatprep.subr.mxu0 0.0
    %888 = vmatpush1.msra.mxu0 0.0
    %889 = vmatprep.subr.mxu0 0.0
    %890 = vmatpush1.msra.mxu0 0.0
    %891 = vmatprep.subr.mxu0 0.0
    %892 = vmatpush1.msra.mxu0 0.0
    %893 = vmatprep.subr.mxu0 0.0
    %894 = vmatpush1.msra.mxu0 0.0
    %895 = vmatprep.subr.mxu0 0.0
    %896 = vmatpush1.msra.mxu0 0.0
    %897 = vmatprep.subr.mxu0 0.0
    %898 = vmatpush1.msra.mxu0 0.0
    %899 = vmatprep.mubr.f32.mxu0 0.0
    %900 = vmatmul.mubr.f32.gmra.mrb[0].mxu0 %v177
    %v901 = vpop.f32.mrb[0].mxu0
    %v902 = vadd.f32 %v173, %v901
    %v903 = vpop.f32.mrb[0].mxu0
    %904 = vdwg.mxu0
    %905 = vxpose.xlu0.b32.start [1/16] %v902, 128
    %906 = vxpose.xlu0.b32.cont [2/16] 0.0, 128
    %907 = vxpose.xlu0.b32.cont [3/16] 0.0, 128
    %908 = vxpose.xlu0.b32.cont [4/16] 0.0, 128
    %909 = vxpose.xlu0.b32.cont [5/16] 0.0, 128
    %910 = vxpose.xlu0.b32.cont [6/16] 0.0, 128
    %911 = vxpose.xlu0.b32.cont [7/16] 0.0, 128
    %912 = vxpose.xlu0.b32.cont [8/16] 0.0, 128
    %913 = vxpose.xlu0.b32.cont [9/16] 0.0, 128
    %914 = vxpose.xlu0.b32.cont [10/16] 0.0, 128
    %915 = vxpose.xlu0.b32.cont [11/16] 0.0, 128
    %916 = vxpose.xlu0.b32.cont [12/16] 0.0, 128
    %917 = vxpose.xlu0.b32.cont [13/16] 0.0, 128
    %918 = vxpose.xlu0.b32.cont [14/16] 0.0, 128
    %919 = vxpose.xlu0.b32.cont [15/16] 0.0, 128
    %920 = vxpose.xlu0.b32.end [16/16] 0.0, 128
    %v921 = vpop.trf.xlu0
    %v922 = vpop.trf.xlu0
    %v923 = vpop.trf.xlu0
    %v924 = vpop.trf.xlu0
    %v925 = vpop.trf.xlu0
    %v926 = vpop.trf.xlu0
    %v927 = vpop.trf.xlu0
    %v928 = vpop.trf.xlu0
    %v929 = vpop.trf.xlu0
    %v930 = vpop.trf.xlu0
    %v931 = vpop.trf.xlu0
    %v932 = vpop.trf.xlu0
    %v933 = vpop.trf.xlu0
    %v934 = vpop.trf.xlu0
    %v935 = vpop.trf.xlu0
    %v936 = vpop.trf.xlu0
    %v938 = vsel %vm281, %v921, 0
    %v941 = vsel %vm281, %v922, 0
    %v944 = vsel %vm281, %v923, 0
    %v947 = vsel %vm281, %v924, 0
    %v950 = vsel %vm281, %v925, 0
    %v953 = vsel %vm281, %v926, 0
    %v956 = vsel %vm281, %v927, 0
    %v959 = vsel %vm281, %v928, 0
    %v962 = vsel %vm306, %v832, 0
    %964 = vmatprep.subr.mxu0 0.0
    %965 = vmatpush1.msra.mxu0 %v962
    %966 = vmatprep.subr.mxu0 0.0
    %967 = vmatpush1.msra.mxu0 0.0
    %968 = vmatprep.subr.mxu0 0.0
    %969 = vmatpush1.msra.mxu0 0.0
    %970 = vmatprep.subr.mxu0 0.0
    %971 = vmatpush1.msra.mxu0 0.0
    %972 = vmatprep.subr.mxu0 0.0
    %973 = vmatpush1.msra.mxu0 0.0
    %974 = vmatprep.subr.mxu0 0.0
    %975 = vmatpush1.msra.mxu0 0.0
    %976 = vmatprep.subr.mxu0 0.0
    %977 = vmatpush1.msra.mxu0 0.0
    %978 = vmatprep.subr.mxu0 0.0
    %979 = vmatpush1.msra.mxu0 0.0
    %980 = vmatprep.subr.mxu0 0.0
    %981 = vmatpush1.msra.mxu0 0.0
    %982 = vmatprep.subr.mxu0 0.0
    %983 = vmatpush1.msra.mxu0 0.0
    %984 = vmatprep.subr.mxu0 0.0
    %985 = vmatpush1.msra.mxu0 0.0
    %986 = vmatprep.subr.mxu0 0.0
    %987 = vmatpush1.msra.mxu0 0.0
    %988 = vmatprep.subr.mxu0 0.0
    %989 = vmatpush1.msra.mxu0 0.0
    %990 = vmatprep.subr.mxu0 0.0
    %991 = vmatpush1.msra.mxu0 0.0
    %992 = vmatprep.subr.mxu0 0.0
    %993 = vmatpush1.msra.mxu0 0.0
    %994 = vmatprep.subr.mxu0 0.0
    %995 = vmatpush1.msra.mxu0 0.0
    %996 = vmatprep.subr.mxu0 0.0
    %997 = vmatpush1.msra.mxu0 0.0
    %998 = vmatprep.subr.mxu0 0.0
    %999 = vmatpush1.msra.mxu0 0.0
    %1000 = vmatprep.subr.mxu0 0.0
    %1001 = vmatpush1.msra.mxu0 0.0
    %1002 = vmatprep.subr.mxu0 0.0
    %1003 = vmatpush1.msra.mxu0 0.0
    %1004 = vmatprep.subr.mxu0 0.0
    %1005 = vmatpush1.msra.mxu0 0.0
    %1006 = vmatprep.subr.mxu0 0.0
    %1007 = vmatpush1.msra.mxu0 0.0
    %1008 = vmatprep.subr.mxu0 0.0
    %1009 = vmatpush1.msra.mxu0 0.0
    %1010 = vmatprep.subr.mxu0 0.0
    %1011 = vmatpush1.msra.mxu0 0.0
    %1012 = vmatprep.subr.mxu0 0.0
    %1013 = vmatpush1.msra.mxu0 0.0
    %1014 = vmatprep.subr.mxu0 0.0
    %1015 = vmatpush1.msra.mxu0 0.0
    %1016 = vmatprep.subr.mxu0 0.0
    %1017 = vmatpush1.msra.mxu0 0.0
    %1018 = vmatprep.subr.mxu0 0.0
    %1019 = vmatpush1.msra.mxu0 0.0
    %1020 = vmatprep.subr.mxu0 0.0
    %1021 = vmatpush1.msra.mxu0 0.0
    %1022 = vmatprep.subr.mxu0 0.0
    %1023 = vmatpush1.msra.mxu0 0.0
    %1024 = vmatprep.subr.mxu0 0.0
    %1025 = vmatpush1.msra.mxu0 0.0
    %1026 = vmatprep.subr.mxu0 0.0
    %1027 = vmatpush1.msra.mxu0 0.0
    %1028 = vmatprep.mubr.f32.mxu0 0.0
    %1029 = vmatmul.mubr.f32.gmra.mrb[0].mxu0 %v938
    %v1030 = vpop.f32.mrb[0].mxu0
    %v1031 = vadd.f32 0.0, %v1030
    %v1032 = vpop.f32.mrb[0].mxu0
    %1033 = vmatprep.mubr.f32.mxu0 0.0
    %1034 = vmatmul.mubr.f32.gmra.mrb[0].mxu0 %v941
    %v1035 = vpop.f32.mrb[0].mxu0
    %v1036 = vadd.f32 0.0, %v1035
    %v1037 = vpop.f32.mrb[0].mxu0
    %1038 = vmatprep.mubr.f32.mxu0 0.0
    %1039 = vmatmul.mubr.f32.gmra.mrb[0].mxu0 %v944
    %v1040 = vpop.f32.mrb[0].mxu0
    %v1041 = vadd.f32 0.0, %v1040
    %v1042 = vpop.f32.mrb[0].mxu0
    %1043 = vmatprep.mubr.f32.mxu0 0.0
    %1044 = vmatmul.mubr.f32.gmra.mrb[0].mxu0 %v947
    %v1045 = vpop.f32.mrb[0].mxu0
    %v1046 = vadd.f32 0.0, %v1045
    %v1047 = vpop.f32.mrb[0].mxu0
    %1048 = vmatprep.mubr.f32.mxu0 0.0
    %1049 = vmatmul.mubr.f32.gmra.mrb[0].mxu0 %v950
    %v1050 = vpop.f32.mrb[0].mxu0
    %v1051 = vadd.f32 0.0, %v1050
    %v1052 = vpop.f32.mrb[0].mxu0
    %1053 = vmatprep.mubr.f32.mxu0 0.0
    %1054 = vmatmul.mubr.f32.gmra.mrb[0].mxu0 %v953
    %v1055 = vpop.f32.mrb[0].mxu0
    %v1056 = vadd.f32 0.0, %v1055
    %v1057 = vpop.f32.mrb[0].mxu0
    %1058 = vmatprep.mubr.f32.mxu0 0.0
    %1059 = vmatmul.mubr.f32.gmra.mrb[0].mxu0 %v956
    %v1060 = vpop.f32.mrb[0].mxu0
    %v1061 = vadd.f32 0.0, %v1060
    %v1062 = vpop.f32.mrb[0].mxu0
    %1063 = vmatprep.mubr.f32.mxu0 0.0
    %1064 = vmatmul.mubr.f32.gmra.mrb[0].mxu0 %v959
    %v1065 = vpop.f32.mrb[0].mxu0
    %v1066 = vadd.f32 0.0, %v1065
    %v1067 = vpop.f32.mrb[0].mxu0
    %1068 = vdwg.mxu0
    %v1069 = vrot.slane %v832, 4
    %v1070 = vsel %vm416, %v1069, 0
    %v1073 = vsel %vm416, %v1031, 0
    %v1076 = vsel %vm416, %v1036, 0
    %v1079 = vsel %vm416, %v1041, 0
    %v1082 = vsel %vm416, %v1046, 0
    %v1085 = vsel %vm416, %v1051, 0
    %v1088 = vsel %vm416, %v1056, 0
    %v1091 = vsel %vm416, %v1061, 0
    %v1094 = vsel %vm416, %v1066, 0
    %1096 = vmatprep.subr.mxu0 0.0
    %1097 = vmatpush1.xpose.msra.mxu0 %v1073
    %1098 = vmatprep.subr.mxu0 0.0
    %1099 = vmatpush1.xpose.msra.mxu0 %v1076
    %1100 = vmatprep.subr.mxu0 0.0
    %1101 = vmatpush1.xpose.msra.mxu0 %v1079
    %1102 = vmatprep.subr.mxu0 0.0
    %1103 = vmatpush1.xpose.msra.mxu0 %v1082
    %1104 = vmatprep.subr.mxu0 0.0
    %1105 = vmatpush1.xpose.msra.mxu0 %v1085
    %1106 = vmatprep.subr.mxu0 0.0
    %1107 = vmatpush1.xpose.msra.mxu0 %v1088
    %1108 = vmatprep.subr.mxu0 0.0
    %1109 = vmatpush1.xpose.msra.mxu0 %v1091
    %1110 = vmatprep.subr.mxu0 0.0
    %1111 = vmatpush1.xpose.msra.mxu0 %v1094
    %1112 = vmatprep.subr.mxu0 0.0
    %1113 = vmatpush1.xpose.msra.mxu0 0.0
    %1114 = vmatprep.subr.mxu0 0.0
    %1115 = vmatpush1.xpose.msra.mxu0 0.0
    %1116 = vmatprep.subr.mxu0 0.0
    %1117 = vmatpush1.xpose.msra.mxu0 0.0
    %1118 = vmatprep.subr.mxu0 0.0
    %1119 = vmatpush1.xpose.msra.mxu0 0.0
    %1120 = vmatprep.subr.mxu0 0.0
    %1121 = vmatpush1.xpose.msra.mxu0 0.0
    %1122 = vmatprep.subr.mxu0 0.0
    %1123 = vmatpush1.xpose.msra.mxu0 0.0
    %1124 = vmatprep.subr.mxu0 0.0
    %1125 = vmatpush1.xpose.msra.mxu0 0.0
    %1126 = vmatprep.subr.mxu0 0.0
    %1127 = vmatpush1.xpose.msra.mxu0 0.0
    %1128 = vmatprep.subr.mxu0 0.0
    %1129 = vmatpush1.xpose.msra.mxu0 0.0
    %1130 = vmatprep.subr.mxu0 0.0
    %1131 = vmatpush1.xpose.msra.mxu0 0.0
    %1132 = vmatprep.subr.mxu0 0.0
    %1133 = vmatpush1.xpose.msra.mxu0 0.0
    %1134 = vmatprep.subr.mxu0 0.0
    %1135 = vmatpush1.xpose.msra.mxu0 0.0
    %1136 = vmatprep.subr.mxu0 0.0
    %1137 = vmatpush1.xpose.msra.mxu0 0.0
    %1138 = vmatprep.subr.mxu0 0.0
    %1139 = vmatpush1.xpose.msra.mxu0 0.0
    %1140 = vmatprep.subr.mxu0 0.0
    %1141 = vmatpush1.xpose.msra.mxu0 0.0
    %1142 = vmatprep.subr.mxu0 0.0
    %1143 = vmatpush1.xpose.msra.mxu0 0.0
    %1144 = vmatprep.subr.mxu0 0.0
    %1145 = vmatpush1.xpose.msra.mxu0 0.0
    %1146 = vmatprep.subr.mxu0 0.0
    %1147 = vmatpush1.xpose.msra.mxu0 0.0
    %1148 = vmatprep.subr.mxu0 0.0
    %1149 = vmatpush1.xpose.msra.mxu0 0.0
    %1150 = vmatprep.subr.mxu0 0.0
    %1151 = vmatpush1.xpose.msra.mxu0 0.0
    %1152 = vmatprep.subr.mxu0 0.0
    %1153 = vmatpush1.xpose.msra.mxu0 0.0
    %1154 = vmatprep.subr.mxu0 0.0
    %1155 = vmatpush1.xpose.msra.mxu0 0.0
    %1156 = vmatprep.subr.mxu0 0.0
    %1157 = vmatpush1.xpose.msra.mxu0 0.0
    %1158 = vmatprep.subr.mxu0 0.0
    %1159 = vmatpush1.xpose.msra.mxu0 0.0
    %1160 = vmatprep.mubr.f32.mxu0 0.0
    %1161 = vmatmul.mubr.f32.gmra.mrb[0].mxu0 %v1070
    %v1162 = vpop.f32.mrb[0].mxu0
    %v1163 = vadd.f32 0.0, %v1162
    %v1164 = vpop.f32.mrb[0].mxu0
    %1165 = vdwg.mxu0
    %v1166 = vmul.f32 %v1163, 0.015625
    %v1168 = vrot.slane %v902, 4
    %v1169 = vsel %vm416, %v1168, 0
    %1171 = vmatprep.subr.mxu0 0.0
    %1172 = vmatpush1.msra.mxu0 %v1031
    %1173 = vmatprep.subr.mxu0 0.0
    %1174 = vmatpush1.msra.mxu0 %v1036
    %1175 = vmatprep.subr.mxu0 0.0
    %1176 = vmatpush1.msra.mxu0 %v1041
    %1177 = vmatprep.subr.mxu0 0.0
    %1178 = vmatpush1.msra.mxu0 %v1046
    %1179 = vmatprep.subr.mxu0 0.0
    %1180 = vmatpush1.msra.mxu0 %v1051
    %1181 = vmatprep.subr.mxu0 0.0
    %1182 = vmatpush1.msra.mxu0 %v1056
    %1183 = vmatprep.subr.mxu0 0.0
    %1184 = vmatpush1.msra.mxu0 %v1061
    %1185 = vmatprep.subr.mxu0 0.0
    %1186 = vmatpush1.msra.mxu0 %v1066
    %1187 = vmatprep.subr.mxu0 0.0
    %1188 = vmatpush1.msra.mxu0 0.0
    %1189 = vmatprep.subr.mxu0 0.0
    %1190 = vmatpush1.msra.mxu0 0.0
    %1191 = vmatprep.subr.mxu0 0.0
    %1192 = vmatpush1.msra.mxu0 0.0
    %1193 = vmatprep.subr.mxu0 0.0
    %1194 = vmatpush1.msra.mxu0 0.0
    %1195 = vmatprep.subr.mxu0 0.0
    %1196 = vmatpush1.msra.mxu0 0.0
    %1197 = vmatprep.subr.mxu0 0.0
    %1198 = vmatpush1.msra.mxu0 0.0
    %1199 = vmatprep.subr.mxu0 0.0
    %1200 = vmatpush1.msra.mxu0 0.0
    %1201 = vmatprep.subr.mxu0 0.0
    %1202 = vmatpush1.msra.mxu0 0.0
    %1203 = vmatprep.subr.mxu0 0.0
    %1204 = vmatpush1.msra.mxu0 0.0
    %1205 = vmatprep.subr.mxu0 0.0
    %1206 = vmatpush1.msra.mxu0 0.0
    %1207 = vmatprep.subr.mxu0 0.0
    %1208 = vmatpush1.msra.mxu0 0.0
    %1209 = vmatprep.subr.mxu0 0.0
    %1210 = vmatpush1.msra.mxu0 0.0
    %1211 = vmatprep.subr.mxu0 0.0
    %1212 = vmatpush1.msra.mxu0 0.0
    %1213 = vmatprep.subr.mxu0 0.0
    %1214 = vmatpush1.msra.mxu0 0.0
    %1215 = vmatprep.subr.mxu0 0.0
    %1216 = vmatpush1.msra.mxu0 0.0
    %1217 = vmatprep.subr.mxu0 0.0
    %1218 = vmatpush1.msra.mxu0 0.0
    %1219 = vmatprep.subr.mxu0 0.0
    %1220 = vmatpush1.msra.mxu0 0.0
    %1221 = vmatprep.subr.mxu0 0.0
    %1222 = vmatpush1.msra.mxu0 0.0
    %1223 = vmatprep.subr.mxu0 0.0
    %1224 = vmatpush1.msra.mxu0 0.0
    %1225 = vmatprep.subr.mxu0 0.0
    %1226 = vmatpush1.msra.mxu0 0.0
    %1227 = vmatprep.subr.mxu0 0.0
    %1228 = vmatpush1.msra.mxu0 0.0
    %1229 = vmatprep.subr.mxu0 0.0
    %1230 = vmatpush1.msra.mxu0 0.0
    %1231 = vmatprep.subr.mxu0 0.0
    %1232 = vmatpush1.msra.mxu0 0.0
    %1233 = vmatprep.subr.mxu0 0.0
    %1234 = vmatpush1.msra.mxu0 0.0
    %1235 = vmatprep.mubr.f32.mxu0 0.0
    %1236 = vmatmul.mubr.f32.gmra.mrb[0].mxu0 %v1169
    %v1237 = vpop.f32.mrb[0].mxu0
    %v1238 = vadd.f32 0.0, %v1237
    %v1239 = vpop.f32.mrb[0].mxu0
    %1240 = vdwg.mxu0
    %v1241 = vmul.f32 %v1238, 0.015625
    %v1243 = vsel %vm306, %v1166, 0
    %1245 = vmatprep.subr.mxu0 0.0
    %1246 = vmatpush1.msra.mxu0 %v1243
    %1247 = vmatprep.subr.mxu0 0.0
    %1248 = vmatpush1.msra.mxu0 0.0
    %1249 = vmatprep.subr.mxu0 0.0
    %1250 = vmatpush1.msra.mxu0 0.0
    %1251 = vmatprep.subr.mxu0 0.0
    %1252 = vmatpush1.msra.mxu0 0.0
    %1253 = vmatprep.subr.mxu0 0.0
    %1254 = vmatpush1.msra.mxu0 0.0
    %1255 = vmatprep.subr.mxu0 0.0
    %1256 = vmatpush1.msra.mxu0 0.0
    %1257 = vmatprep.subr.mxu0 0.0
    %1258 = vmatpush1.msra.mxu0 0.0
    %1259 = vmatprep.subr.mxu0 0.0
    %1260 = vmatpush1.msra.mxu0 0.0
    %1261 = vmatprep.subr.mxu0 0.0
    %1262 = vmatpush1.msra.mxu0 0.0
    %1263 = vmatprep.subr.mxu0 0.0
    %1264 = vmatpush1.msra.mxu0 0.0
    %1265 = vmatprep.subr.mxu0 0.0
    %1266 = vmatpush1.msra.mxu0 0.0
    %1267 = vmatprep.subr.mxu0 0.0
    %1268 = vmatpush1.msra.mxu0 0.0
    %1269 = vmatprep.subr.mxu0 0.0
    %1270 = vmatpush1.msra.mxu0 0.0
    %1271 = vmatprep.subr.mxu0 0.0
    %1272 = vmatpush1.msra.mxu0 0.0
    %1273 = vmatprep.subr.mxu0 0.0
    %1274 = vmatpush1.msra.mxu0 0.0
    %1275 = vmatprep.subr.mxu0 0.0
    %1276 = vmatpush1.msra.mxu0 0.0
    %1277 = vmatprep.subr.mxu0 0.0
    %1278 = vmatpush1.msra.mxu0 0.0
    %1279 = vmatprep.subr.mxu0 0.0
    %1280 = vmatpush1.msra.mxu0 0.0
    %1281 = vmatprep.subr.mxu0 0.0
    %1282 = vmatpush1.msra.mxu0 0.0
    %1283 = vmatprep.subr.mxu0 0.0
    %1284 = vmatpush1.msra.mxu0 0.0
    %1285 = vmatprep.subr.mxu0 0.0
    %1286 = vmatpush1.msra.mxu0 0.0
    %1287 = vmatprep.subr.mxu0 0.0
    %1288 = vmatpush1.msra.mxu0 0.0
    %1289 = vmatprep.subr.mxu0 0.0
    %1290 = vmatpush1.msra.mxu0 0.0
    %1291 = vmatprep.subr.mxu0 0.0
    %1292 = vmatpush1.msra.mxu0 0.0
    %1293 = vmatprep.subr.mxu0 0.0
    %1294 = vmatpush1.msra.mxu0 0.0
    %1295 = vmatprep.subr.mxu0 0.0
    %1296 = vmatpush1.msra.mxu0 0.0
    %1297 = vmatprep.subr.mxu0 0.0
    %1298 = vmatpush1.msra.mxu0 0.0
    %1299 = vmatprep.subr.mxu0 0.0
    %1300 = vmatpush1.msra.mxu0 0.0
    %1301 = vmatprep.subr.mxu0 0.0
    %1302 = vmatpush1.msra.mxu0 0.0
    %1303 = vmatprep.subr.mxu0 0.0
    %1304 = vmatpush1.msra.mxu0 0.0
    %1305 = vmatprep.subr.mxu0 0.0
    %1306 = vmatpush1.msra.mxu0 0.0
    %1307 = vmatprep.subr.mxu0 0.0
    %1308 = vmatpush1.msra.mxu0 0.0
    %1309 = vmatprep.mubr.f32.mxu0 0.0
    %1310 = vmatmul.mubr.f32.gmra.mrb[0].mxu0 %v595
    %v1311 = vpop.f32.mrb[0].mxu0
    %v1312 = vadd.f32 %v592, %v1311
    %v1313 = vpop.f32.mrb[0].mxu0
    %1314 = vdwg.mxu0
    %s1315 = scalar_lea.vmem [#allocation8], 4
    %1316 = vst.msk [vmem:[%s1315] sm:$0xf] %vm670, %v1312
    %v1318 = vsel %vm306, %v1241, 0
    %1320 = vmatprep.subr.mxu0 0.0
    %1321 = vmatpush1.msra.mxu0 %v1318
    %1322 = vmatprep.subr.mxu0 0.0
    %1323 = vmatpush1.msra.mxu0 0.0
    %1324 = vmatprep.subr.mxu0 0.0
    %1325 = vmatpush1.msra.mxu0 0.0
    %1326 = vmatprep.subr.mxu0 0.0
    %1327 = vmatpush1.msra.mxu0 0.0
    %1328 = vmatprep.subr.mxu0 0.0
    %1329 = vmatpush1.msra.mxu0 0.0
    %1330 = vmatprep.subr.mxu0 0.0
    %1331 = vmatpush1.msra.mxu0 0.0
    %1332 = vmatprep.subr.mxu0 0.0
    %1333 = vmatpush1.msra.mxu0 0.0
    %1334 = vmatprep.subr.mxu0 0.0
    %1335 = vmatpush1.msra.mxu0 0.0
    %1336 = vmatprep.subr.mxu0 0.0
    %1337 = vmatpush1.msra.mxu0 0.0
    %1338 = vmatprep.subr.mxu0 0.0
    %1339 = vmatpush1.msra.mxu0 0.0
    %1340 = vmatprep.subr.mxu0 0.0
    %1341 = vmatpush1.msra.mxu0 0.0
    %1342 = vmatprep.subr.mxu0 0.0
    %1343 = vmatpush1.msra.mxu0 0.0
    %1344 = vmatprep.subr.mxu0 0.0
    %1345 = vmatpush1.msra.mxu0 0.0
    %1346 = vmatprep.subr.mxu0 0.0
    %1347 = vmatpush1.msra.mxu0 0.0
    %1348 = vmatprep.subr.mxu0 0.0
    %1349 = vmatpush1.msra.mxu0 0.0
    %1350 = vmatprep.subr.mxu0 0.0
    %1351 = vmatpush1.msra.mxu0 0.0
    %1352 = vmatprep.subr.mxu0 0.0
    %1353 = vmatpush1.msra.mxu0 0.0
    %1354 = vmatprep.subr.mxu0 0.0
    %1355 = vmatpush1.msra.mxu0 0.0
    %1356 = vmatprep.subr.mxu0 0.0
    %1357 = vmatpush1.msra.mxu0 0.0
    %1358 = vmatprep.subr.mxu0 0.0
    %1359 = vmatpush1.msra.mxu0 0.0
    %1360 = vmatprep.subr.mxu0 0.0
    %1361 = vmatpush1.msra.mxu0 0.0
    %1362 = vmatprep.subr.mxu0 0.0
    %1363 = vmatpush1.msra.mxu0 0.0
    %1364 = vmatprep.subr.mxu0 0.0
    %1365 = vmatpush1.msra.mxu0 0.0
    %1366 = vmatprep.subr.mxu0 0.0
    %1367 = vmatpush1.msra.mxu0 0.0
    %1368 = vmatprep.subr.mxu0 0.0
    %1369 = vmatpush1.msra.mxu0 0.0
    %1370 = vmatprep.subr.mxu0 0.0
    %1371 = vmatpush1.msra.mxu0 0.0
    %1372 = vmatprep.subr.mxu0 0.0
    %1373 = vmatpush1.msra.mxu0 0.0
    %1374 = vmatprep.subr.mxu0 0.0
    %1375 = vmatpush1.msra.mxu0 0.0
    %1376 = vmatprep.subr.mxu0 0.0
    %1377 = vmatpush1.msra.mxu0 0.0
    %1378 = vmatprep.subr.mxu0 0.0
    %1379 = vmatpush1.msra.mxu0 0.0
    %1380 = vmatprep.subr.mxu0 0.0
    %1381 = vmatpush1.msra.mxu0 0.0
    %1382 = vmatprep.subr.mxu0 0.0
    %1383 = vmatpush1.msra.mxu0 0.0
    %1384 = vmatprep.mubr.f32.mxu0 0.0
    %1385 = vmatmul.mubr.f32.gmra.mrb[0].mxu0 %v678
    %v1386 = vpop.f32.mrb[0].mxu0
    %v1387 = vadd.f32 %v675, %v1386
    %v1388 = vpop.f32.mrb[0].mxu0
    %1389 = vdwg.mxu0
    %s1390 = scalar_lea.vmem [#allocation7], 4
    %1391 = vst.msk [vmem:[%s1390] sm:$0xf] %vm670, %v1387
    %s1392 = scalar_lea.vmem [#allocation2], 4
    %1393 = vst.msk [vmem:[%s1392 - $0x4] sm:$0xf0] %vm754, %v902
    %s1394 = scalar_lea.vmem [#allocation3], 4
    %1395 = vst.msk [vmem:[%s1394 - $0x4] sm:$0xf0] %vm754, %v832
    %v1396 = vld [vmem:[%s8] sm:$0xf]
    %v1397 = vld [vmem:[%s9] sm:$0xf]
    %v1398 = vld [vmem:[#allocation2] sm:$0xf]
    %v1399 = vld [vmem:[#allocation2 + $0x4] sm:$0xf]
    %v1400 = vld [vmem:[#allocation8] sm:$0xf]
    %v1401 = vld [vmem:[#allocation8 + $0x4] sm:$0xf]
    %v1402 = vsel %vm670, %v1400, 0.0
    %v1403 = vsel %vm670, %v1401, 0.0
    %v1404 = vadd.f32 %v1402, %v1403
    %1405 = vadd.xlane.f32.xlu0 %v1404
    %v1406 = vpop.xlane.xlu0 %1405
    %v1407 = vrcp.pop 128.0
    %v1408 = vmul.f32 %v1406, %v1407
    %v1409 = vsub.f32 %v1400, %v1408
    %v1410 = vsub.f32 %v1401, %v1408
    %v1411 = vmul.f32 %v1409, %v1409
    %v1412 = vmul.f32 %v1410, %v1410
    %v1413 = vsel %vm670, %v1411, 0.0
    %v1414 = vsel %vm670, %v1412, 0.0
    %v1415 = vadd.f32 %v1413, %v1414
    %1416 = vadd.xlane.f32.xlu0 %v1415
    %v1417 = vpop.xlane.xlu0 %1416
    %v1418 = vmul.f32 %v1417, %v1407
    %v1419 = vadd.f32 %v1418, 1e-05
    %v1420 = vrsqrt.pop %v1419
    %v1421 = vmul.f32 %v1409, %v1420
    %v1422 = vmul.f32 %v1410, %v1420
    %1424 = vset.pattern.permute.xlu0 0
    %1425 = vperm.xlu0 %1424, %v1396
    %v1426 = vpop.permute.xlu0 %1425
    %v1428 = vmul.f32 %v1421, %v1426
    %v1429 = vmul.f32 %v1422, %v1426
    %1431 = vset.pattern.permute.xlu0 0
    %1432 = vperm.xlu0 %1431, %v1397
    %v1433 = vpop.permute.xlu0 %1432
    %v1435 = vadd.f32 %v1428, %v1433
    %v1436 = vadd.f32 %v1429, %v1433
    %v1437 = vadd.f32 %v1435, %v1398
    %v1438 = vadd.f32 %v1436, %v1399
    %v1439 = vld [vmem:[%s12] sm:$0xf]
    %v1440 = vld [vmem:[%s13] sm:$0xf]
    %v1441 = vld [vmem:[#allocation3] sm:$0xf]
    %v1442 = vld [vmem:[#allocation3 + $0x4] sm:$0xf]
    %v1443 = vld [vmem:[#allocation7] sm:$0xf]
    %v1444 = vld [vmem:[#allocation7 + $0x4] sm:$0xf]
    %v1445 = vsel %vm670, %v1443, 0.0
    %v1446 = vsel %vm670, %v1444, 0.0
    %v1447 = vadd.f32 %v1445, %v1446
    %1448 = vadd.xlane.f32.xlu0 %v1447
    %v1449 = vpop.xlane.xlu0 %1448
    %v1450 = vmul.f32 %v1449, %v1407
    %v1451 = vsub.f32 %v1443, %v1450
    %v1452 = vsub.f32 %v1444, %v1450
    %v1453 = vmul.f32 %v1451, %v1451
    %v1454 = vmul.f32 %v1452, %v1452
    %v1455 = vsel %vm670, %v1453, 0.0
    %v1456 = vsel %vm670, %v1454, 0.0
    %v1457 = vadd.f32 %v1455, %v1456
    %1458 = vadd.xlane.f32.xlu0 %v1457
    %v1459 = vpop.xlane.xlu0 %1458
    %v1460 = vmul.f32 %v1459, %v1407
    %v1461 = vadd.f32 %v1460, 1e-05
    %v1462 = vrsqrt.pop %v1461
    %v1463 = vmul.f32 %v1451, %v1462
    %v1464 = vmul.f32 %v1452, %v1462
    %1466 = vset.pattern.permute.xlu0 0
    %1467 = vperm.xlu0 %1466, %v1439
    %v1468 = vpop.permute.xlu0 %1467
    %v1470 = vmul.f32 %v1463, %v1468
    %v1471 = vmul.f32 %v1464, %v1468
    %1473 = vset.pattern.permute.xlu0 0
    %1474 = vperm.xlu0 %1473, %v1440
    %v1475 = vpop.permute.xlu0 %1474
    %v1477 = vadd.f32 %v1470, %v1475
    %v1478 = vadd.f32 %v1471, %v1475
    %v1479 = vadd.f32 %v1477, %v1441
    %v1480 = vadd.f32 %v1478, %v1442
    %v1481 = vsel %vm670, %v1437, 0.0
    %1482 = vadd.xlane.f32.xlu0 %v1481
    %v1483 = vpop.xlane.xlu0 %1482
    %v1484 = vsel %vm670, %v1438, 0.0
    %1485 = vadd.xlane.f32.xlu0 %v1484
    %v1486 = vpop.xlane.xlu0 %1485
    %v1487 = vrcp.pop 64.0
    %v1488 = vmul.f32 %v1483, %v1487
    %v1489 = vmul.f32 %v1486, %v1487
    %v1490 = vsel %vm670, %v1437, -inf
    %1491 = vmax.xlane.f32.xlu0 %v1490
    %v1492 = vpop.xlane.xlu0 %1491
    %v1493 = vsel %vm670, %v1438, -inf
    %1494 = vmax.xlane.f32.xlu0 %v1493
    %v1495 = vpop.xlane.xlu0 %1494
    %v1498 = vlaneseq
    %v1499 = vand.u32 %v1498, 127
    %v1500 = vlaneseq
    %v1501 = vshrl.u32 %v1500, 7
    %v1502 = vsub.s32 %v1499, %v1501
    %v1503 = vrot.slane %v1488, %v1502
    %v1504 = vlaneseq
    %v1505 = vshrl.u32 %v1504, 7
    %v1506 = vsub.s32 %v1499, %v1505
    %v1507 = vrot.slane %v1489, %v1506
    %vm1508 = vcmask 1041409
    %v1509 = vsel %vm1508, %v1507, %v1503
    %v1513 = vlaneseq
    %v1514 = vshrl.u32 %v1513, 7
    %v1515 = vsub.s32 %v1499, %v1514
    %v1516 = vrot.slane %v1492, %v1515
    %v1517 = vlaneseq
    %v1518 = vshrl.u32 %v1517, 7
    %v1519 = vsub.s32 %v1499, %v1518
    %v1520 = vrot.slane %v1495, %v1519
    %vm1521 = vcmask 1043459
    %v1522 = vsel %vm1521, %v1520, %v1516
    %vm1524 = vcmask 1041408
    %v1525 = vsel %vm1524, %v1509, %v1522
    %v1526 = vld [vmem:[%s14] sm:$0xf]
    %v1527 = vld [vmem:[%s15] sm:$0x1]
    %v1529 = vlaneseq
    %v1530 = vshrl.u32 %v1529, 7
    %v1531 = vsub.s32 0, %v1530
    %v1532 = vrot.slane %v1527, %v1531
    %v1535 = vsel %vm281, %v1525, 0
    %v1538 = vsel %vm306, %v1526, 0
    %1540 = vmatprep.subr.mxu0 0.0
    %1541 = vmatpush1.msra.mxu0 %v1538
    %1542 = vmatprep.subr.mxu0 0.0
    %1543 = vmatpush1.msra.mxu0 0.0
    %1544 = vmatprep.subr.mxu0 0.0
    %1545 = vmatpush1.msra.mxu0 0.0
    %1546 = vmatprep.subr.mxu0 0.0
    %1547 = vmatpush1.msra.mxu0 0.0
    %1548 = vmatprep.subr.mxu0 0.0
    %1549 = vmatpush1.msra.mxu0 0.0
    %1550 = vmatprep.subr.mxu0 0.0
    %1551 = vmatpush1.msra.mxu0 0.0
    %1552 = vmatprep.subr.mxu0 0.0
    %1553 = vmatpush1.msra.mxu0 0.0
    %1554 = vmatprep.subr.mxu0 0.0
    %1555 = vmatpush1.msra.mxu0 0.0
    %1556 = vmatprep.subr.mxu0 0.0
    %1557 = vmatpush1.msra.mxu0 0.0
    %1558 = vmatprep.subr.mxu0 0.0
    %1559 = vmatpush1.msra.mxu0 0.0
    %1560 = vmatprep.subr.mxu0 0.0
    %1561 = vmatpush1.msra.mxu0 0.0
    %1562 = vmatprep.subr.mxu0 0.0
    %1563 = vmatpush1.msra.mxu0 0.0
    %1564 = vmatprep.subr.mxu0 0.0
    %1565 = vmatpush1.msra.mxu0 0.0
    %1566 = vmatprep.subr.mxu0 0.0
    %1567 = vmatpush1.msra.mxu0 0.0
    %1568 = vmatprep.subr.mxu0 0.0
    %1569 = vmatpush1.msra.mxu0 0.0
    %1570 = vmatprep.subr.mxu0 0.0
    %1571 = vmatpush1.msra.mxu0 0.0
    %1572 = vmatprep.subr.mxu0 0.0
    %1573 = vmatpush1.msra.mxu0 0.0
    %1574 = vmatprep.subr.mxu0 0.0
    %1575 = vmatpush1.msra.mxu0 0.0
    %1576 = vmatprep.subr.mxu0 0.0
    %1577 = vmatpush1.msra.mxu0 0.0
    %1578 = vmatprep.subr.mxu0 0.0
    %1579 = vmatpush1.msra.mxu0 0.0
    %1580 = vmatprep.subr.mxu0 0.0
    %1581 = vmatpush1.msra.mxu0 0.0
    %1582 = vmatprep.subr.mxu0 0.0
    %1583 = vmatpush1.msra.mxu0 0.0
    %1584 = vmatprep.subr.mxu0 0.0
    %1585 = vmatpush1.msra.mxu0 0.0
    %1586 = vmatprep.subr.mxu0 0.0
    %1587 = vmatpush1.msra.mxu0 0.0
    %1588 = vmatprep.subr.mxu0 0.0
    %1589 = vmatpush1.msra.mxu0 0.0
    %1590 = vmatprep.subr.mxu0 0.0
    %1591 = vmatpush1.msra.mxu0 0.0
    %1592 = vmatprep.subr.mxu0 0.0
    %1593 = vmatpush1.msra.mxu0 0.0
    %1594 = vmatprep.subr.mxu0 0.0
    %1595 = vmatpush1.msra.mxu0 0.0
    %1596 = vmatprep.subr.mxu0 0.0
    %1597 = vmatpush1.msra.mxu0 0.0
    %1598 = vmatprep.subr.mxu0 0.0
    %1599 = vmatpush1.msra.mxu0 0.0
    %1600 = vmatprep.subr.mxu0 0.0
    %1601 = vmatpush1.msra.mxu0 0.0
    %1602 = vmatprep.subr.mxu0 0.0
    %1603 = vmatpush1.msra.mxu0 0.0
    %1604 = vmatprep.mubr.f32.mxu0 0.0
    %1605 = vmatmul.mubr.f32.gmra.mrb[0].mxu0 %v1535
    %v1606 = vpop.f32.mrb[0].mxu0
    %v1607 = vadd.f32 %v1532, %v1606
    %v1608 = vpop.f32.mrb[0].mxu0
    %1609 = vdwg.mxu0
    %v1610 = vmax.f32 %v1607, 0.0
    %v1611 = vld [vmem:[%s16] sm:$0xf]
    %v1612 = vld [vmem:[%s17] sm:$0x1]
    %v1614 = vlaneseq
    %v1615 = vshrl.u32 %v1614, 7
    %v1616 = vsub.s32 0, %v1615
    %v1617 = vrot.slane %v1612, %v1616
    %v1620 = vsel %vm281, %v1610, 0
    %v1623 = vsel %vm306, %v1611, 0
    %1625 = vmatprep.subr.mxu0 0.0
    %1626 = vmatpush1.msra.mxu0 %v1623
    %1627 = vmatprep.subr.mxu0 0.0
    %1628 = vmatpush1.msra.mxu0 0.0
    %1629 = vmatprep.subr.mxu0 0.0
    %1630 = vmatpush1.msra.mxu0 0.0
    %1631 = vmatprep.subr.mxu0 0.0
    %1632 = vmatpush1.msra.mxu0 0.0
    %1633 = vmatprep.subr.mxu0 0.0
    %1634 = vmatpush1.msra.mxu0 0.0
    %1635 = vmatprep.subr.mxu0 0.0
    %1636 = vmatpush1.msra.mxu0 0.0
    %1637 = vmatprep.subr.mxu0 0.0
    %1638 = vmatpush1.msra.mxu0 0.0
    %1639 = vmatprep.subr.mxu0 0.0
    %1640 = vmatpush1.msra.mxu0 0.0
    %1641 = vmatprep.subr.mxu0 0.0
    %1642 = vmatpush1.msra.mxu0 0.0
    %1643 = vmatprep.subr.mxu0 0.0
    %1644 = vmatpush1.msra.mxu0 0.0
    %1645 = vmatprep.subr.mxu0 0.0
    %1646 = vmatpush1.msra.mxu0 0.0
    %1647 = vmatprep.subr.mxu0 0.0
    %1648 = vmatpush1.msra.mxu0 0.0
    %1649 = vmatprep.subr.mxu0 0.0
    %1650 = vmatpush1.msra.mxu0 0.0
    %1651 = vmatprep.subr.mxu0 0.0
    %1652 = vmatpush1.msra.mxu0 0.0
    %1653 = vmatprep.subr.mxu0 0.0
    %1654 = vmatpush1.msra.mxu0 0.0
    %1655 = vmatprep.subr.mxu0 0.0
    %1656 = vmatpush1.msra.mxu0 0.0
    %1657 = vmatprep.subr.mxu0 0.0
    %1658 = vmatpush1.msra.mxu0 0.0
    %1659 = vmatprep.subr.mxu0 0.0
    %1660 = vmatpush1.msra.mxu0 0.0
    %1661 = vmatprep.subr.mxu0 0.0
    %1662 = vmatpush1.msra.mxu0 0.0
    %1663 = vmatprep.subr.mxu0 0.0
    %1664 = vmatpush1.msra.mxu0 0.0
    %1665 = vmatprep.subr.mxu0 0.0
    %1666 = vmatpush1.msra.mxu0 0.0
    %1667 = vmatprep.subr.mxu0 0.0
    %1668 = vmatpush1.msra.mxu0 0.0
    %1669 = vmatprep.subr.mxu0 0.0
    %1670 = vmatpush1.msra.mxu0 0.0
    %1671 = vmatprep.subr.mxu0 0.0
    %1672 = vmatpush1.msra.mxu0 0.0
    %1673 = vmatprep.subr.mxu0 0.0
    %1674 = vmatpush1.msra.mxu0 0.0
    %1675 = vmatprep.subr.mxu0 0.0
    %1676 = vmatpush1.msra.mxu0 0.0
    %1677 = vmatprep.subr.mxu0 0.0
    %1678 = vmatpush1.msra.mxu0 0.0
    %1679 = vmatprep.subr.mxu0 0.0
    %1680 = vmatpush1.msra.mxu0 0.0
    %1681 = vmatprep.subr.mxu0 0.0
    %1682 = vmatpush1.msra.mxu0 0.0
    %1683 = vmatprep.subr.mxu0 0.0
    %1684 = vmatpush1.msra.mxu0 0.0
    %1685 = vmatprep.subr.mxu0 0.0
    %1686 = vmatpush1.msra.mxu0 0.0
    %1687 = vmatprep.subr.mxu0 0.0
    %1688 = vmatpush1.msra.mxu0 0.0
    %1689 = vmatprep.mubr.f32.mxu0 0.0
    %1690 = vmatmul.mubr.f32.gmra.mrb[0].mxu0 %v1620
    %v1691 = vpop.f32.mrb[0].mxu0
    %v1692 = vadd.f32 %v1617, %v1691
    %v1693 = vpop.f32.mrb[0].mxu0
    %1694 = vdwg.mxu0
    %v1696 = vrot.slane %v1692, 2
    %v1698 = vadd.f32 %v1692, %v1696
    %v1699 = vxor.u32 %v1698, 2147483648
    %v1700 = vmul.f32 %v1699, 1.442695
    %v1701 = vpow.pop %v1700
    %v1702 = vadd.f32 %v1701, 1.0
    %v1703 = vrcp.pop %v1702
    %v1704 = vmul.f32 1.0, %v1703
    %v1705 = vlaneseq
    %v1706 = vshrl.u32 %v1705, 7
    %v1707 = vsub.s32 0, %v1706
    %v1708 = vrot.slane %v1704, %v1707
    %1710 = vbcast.lane.b32.xlu0 %v1708, 256
    %v1711 = vpop.permute.xlu0 %1710
    %v1712 = vlaneseq
    %v1713 = vshrl.u32 %v1712, 7
    %v1714 = vsub.s32 1, %v1713
    %v1715 = vrot.slane %v1704, %v1714
    %1717 = vbcast.lane.b32.xlu0 %v1715, 256
    %v1718 = vpop.permute.xlu0 %1717
    %v1719 = vmul.f32 %v1437, %v1711
    %v1720 = vmul.f32 %v1438, %v1718
    %1721 = vst.msk [vmem:[#allocation8] sm:$0xf] %vm670, %v1719
    %1722 = vst.msk [vmem:[#allocation8 + $0x4] sm:$0xf] %vm670, %v1720
    %v1723 = vmul.f32 %v1479, %v1711
    %v1724 = vmul.f32 %v1480, %v1718
    %1725 = vst.msk [vmem:[#allocation7] sm:$0xf] %vm670, %v1723
    %1726 = vst.msk [vmem:[#allocation7 + $0x4] sm:$0xf] %vm670, %v1724
    // Predicated region
    $region78: #{tpu_custom_call.1} parent=1 // pred_check
      _
    $region79: #{tpu_custom_call.1} parent=1 // pred_check_branch
      %1728 = sbr.rel (0) target = $region81
    $region80: #{tpu_custom_call.1} parent=1 // pred_region
      %s1730 = ssub.s32 128, 128
      %1731 = vsyncadd [#allocation6], %s1730
      %s1732 = sshll.u32 [#allocation7], 4
      %s1733 = int_to_ptr.vmem [resolvable:$true] %s1732
      %1738 = dma.vmem_to_hbm [thread:$0]  %s1733, 128, %s18, [#allocation6], 64, 64, 4
    $region81: #{tpu_custom_call.1} parent=1 // pred_fallthru
      _
    // Predicated region
    $region82: #{tpu_custom_call.1} parent=1 // pred_check
      _
    $region83: #{tpu_custom_call.1} parent=1 // pred_check_branch
      %1740 = sbr.rel (0) target = $region85
    $region84: #{tpu_custom_call.1} parent=1 // pred_region
      %s1742 = ssub.s32 128, 128
      %1743 = vsyncadd [#allocation9], %s1742
      %s1744 = sshll.u32 [#allocation8], 4
      %s1745 = int_to_ptr.vmem [resolvable:$true] %s1744
      %1750 = dma.vmem_to_hbm [thread:$0]  %s1745, 128, %s19, [#allocation9], 64, 64, 4
    $region85: #{tpu_custom_call.1} parent=1 // pred_fallthru
      _
    // Predicated region
    $region86: #{tpu_custom_call.1} parent=1 // pred_check
      _
    $region87: #{tpu_custom_call.1} parent=1 // pred_check_branch
      %1752 = sbr.rel (0) target = $region89
    $region88: #{tpu_custom_call.1} parent=1 // pred_region
      %1753 = dma.done [#allocation6], 128
    $region89: #{tpu_custom_call.1} parent=1 // pred_fallthru
      _
    // Predicated region
    $region90: #{tpu_custom_call.1} parent=1 // pred_check
      _
    $region91: #{tpu_custom_call.1} parent=1 // pred_check_branch
      %1755 = sbr.rel (0) target = $region93
    $region92: #{tpu_custom_call.1} parent=1 // pred_region
      %1756 = dma.done [#allocation9], 128
    $region93: #{tpu_custom_call.1} parent=1 // pred_fallthru
      _
    %1757 = vsyncpa [#allocation5], 1
    %1758 = vsyncpa [#allocation6], 1
    %1759 = vsyncpa [#allocation9], 1

</llo_original>
